<compile_context>
chip_gen: v7x
topology: tpu7x:2x2x1
jax: 0.10.0
libtpu: 0.0.40
codegen_flags: <defaults>
</compile_context>

<pallas_src>
import functools

import jax
import jax.numpy as jnp
from jax.experimental import pallas as pl
from jax.experimental.pallas import tpu as pltpu

# The module defines its own InstanceNorm with epsilon=1e-08 (NOT nn.InstanceNorm2d's 1e-5).
EPS = 1e-8


def _resblock_adain_kernel(x_ref, st1_ref, st2_ref, w1_ref, b1_ref, w2_ref, b2_ref,
                           out_ref, patch_ref, *, H, W, C):
    S = H * W
    x = x_ref[0].astype(jnp.float32)                        # (C, S)

    # Column-boundary masks for the horizontal taps (built once, reused by both convs).
    col = jax.lax.broadcasted_iota(jnp.int32, (1, S), 1) % W
    ok_left = col > 0            # source column w-1 exists
    ok_right = col < (W - 1)     # source column w+1 exists

    def build_patch(act_bf16):
        # im2col into the (9C, S) bf16 scratch: tap t=(dy+1)*3+(dx+1) occupies rows
        # [t*C, (t+1)*C).  Shifting the flat spatial index by dy*W+dx with zero fill
        # plus the column mask implements the 'zero' conv padding exactly.
        taps = [(dy, dx) for dy in (-1, 0, 1) for dx in (-1, 0, 1)]
        for t, (dy, dx) in enumerate(taps):
            off = dy * W + dx
            if off > 0:
                shifted = jnp.concatenate(
                    [act_bf16[:, off:], jnp.zeros((C, off), jnp.bfloat16)], axis=1)
            elif off < 0:
                shifted = jnp.concatenate(
                    [jnp.zeros((C, -off), jnp.bfloat16), act_bf16[:, :S + off]], axis=1)
            else:
                shifted = act_bf16
            if dx == -1:
                shifted = jnp.where(ok_left, shifted, 0.0)
            elif dx == 1:
                shifted = jnp.where(ok_right, shifted, 0.0)
            patch_ref[t * C:(t + 1) * C, :] = shifted        # aligned (C is a multiple of 8)

    def conv3x3(act_f32, w_ref_, b_ref_):
        build_patch(act_f32.astype(jnp.bfloat16))
        y = jnp.dot(w_ref_[...], patch_ref[...],             # (C, 9C) x (9C, S), bf16 -> f32
                    preferred_element_type=jnp.float32)
        return y + b_ref_[...]                               # bias (C, 1), f32

    def instance_norm(y):                                    # per-channel over spatial (lanes)
        mu = jnp.mean(y, axis=1, keepdims=True)
        yc = y - mu
        var = jnp.mean(yc * yc, axis=1, keepdims=True)
        return yc * jax.lax.rsqrt(var + EPS)

    def apply_style(y, st_ref):                              # AdaIN: y*(scale+1) + shift
        st = st_ref[0]                                       # (2C, 1) f32, precomputed affine
        return y * (st[:C, :] + 1.0) + st[C:, :]

    # conv1 -> InstanceNorm -> style1 -> ReLU
    y = conv3x3(x, w1_ref, b1_ref)
    y = instance_norm(y)
    y = apply_style(y, st1_ref)
    y = jnp.maximum(y, 0.0)

    # conv2 -> InstanceNorm -> style2
    y = conv3x3(y, w2_ref, b2_ref)
    y = instance_norm(y)
    y = apply_style(y, st2_ref)

    # residual connection
    out_ref[0] = (x + y).astype(out_ref.dtype)


def resnet_block_adain(x_nchw, latent, params):
    """x_nchw: (B, C, H, W) float32, latent: (B, L) float32."""
    B, C, H, W = x_nchw.shape
    S = H * W

    # Free reshape: channels -> sublanes, flattened spatial -> lanes (lane-dense, 256 wide).
    x_flat = x_nchw.reshape(B, C, S)

    # Hoisted ApplyStyle linears: tiny (B,L)x(L,2C) matmuls stay in XLA; kernel only
    # sees the resulting per-sample affine parameters.
    st1 = (latent @ params["sw1"] + params["sb1"]).astype(jnp.float32).reshape(B, 2 * C, 1)
    st2 = (latent @ params["sw2"] + params["sb2"]).astype(jnp.float32).reshape(B, 2 * C, 1)

    # Conv weights pre-fused on the host to (Cout, 9*Cin), tap-major (matches the
    # in-kernel im2col row order), and cast to bf16 for the MXU.
    w1f = jnp.transpose(params["w1"], (3, 0, 1, 2)).reshape(C, 9 * C).astype(jnp.bfloat16)
    w2f = jnp.transpose(params["w2"], (3, 0, 1, 2)).reshape(C, 9 * C).astype(jnp.bfloat16)
    b1 = params["b1"].reshape(C, 1).astype(jnp.float32)
    b2 = params["b2"].reshape(C, 1).astype(jnp.float32)

    kernel = functools.partial(_resblock_adain_kernel, H=H, W=W, C=C)

    out_flat = pl.pallas_call(
        kernel,
        out_shape=jax.ShapeDtypeStruct((B, C, S), x_nchw.dtype),
        grid_spec=pltpu.PrefetchScalarGridSpec(
            num_scalar_prefetch=0,
            grid=(B,),
            in_specs=[
                pl.BlockSpec((1, C, S), lambda b: (b, 0, 0)),       # x, lane-dense
                pl.BlockSpec((1, 2 * C, 1), lambda b: (b, 0, 0)),   # style1 affine
                pl.BlockSpec((1, 2 * C, 1), lambda b: (b, 0, 0)),   # style2 affine
                pl.BlockSpec((C, 9 * C), lambda b: (0, 0)),         # conv1 fused weight (bf16)
                pl.BlockSpec((C, 1), lambda b: (0, 0)),             # conv1 bias (f32)
                pl.BlockSpec((C, 9 * C), lambda b: (0, 0)),         # conv2 fused weight (bf16)
                pl.BlockSpec((C, 1), lambda b: (0, 0)),             # conv2 bias (f32)
            ],
            out_specs=pl.BlockSpec((1, C, S), lambda b: (b, 0, 0)),  # lane-dense output
            scratch_shapes=[pltpu.VMEM((9 * C, S), jnp.bfloat16)],   # im2col patch
        ),
        compiler_params=pltpu.CompilerParams(
            dimension_semantics=("parallel",)),
    )(x_flat, st1, st2, w1f, b1, w2f, b2)

    return out_flat.reshape(B, C, H, W)


def init_params(key, dim, latent_size):
    """Deterministic synthetic parameters (shapes match the nn.Module __init__)."""
    ks = jax.random.split(key, 8)
    s = 0.1
    return {
        # conv weights in HWIO layout: (3, 3, Cin, Cout)
        "w1": jax.random.normal(ks[0], (3, 3, dim, dim), jnp.float32) * s,
        "b1": jax.random.normal(ks[1], (dim,), jnp.float32) * s,
        "sw1": jax.random.normal(ks[2], (latent_size, 2 * dim), jnp.float32) * s,
        "sb1": jax.random.normal(ks[3], (2 * dim,), jnp.float32) * s,
        "w2": jax.random.normal(ks[4], (3, 3, dim, dim), jnp.float32) * s,
        "b2": jax.random.normal(ks[5], (dim,), jnp.float32) * s,
        "sw2": jax.random.normal(ks[6], (latent_size, 2 * dim), jnp.float32) * s,
        "sb2": jax.random.normal(ks[7], (2 * dim,), jnp.float32) * s,
    }


def reference_forward(x_nchw, latent, params):
    """Pure-JAX (f32) reference of ResnetBlock_Adain.forward (padding_type='zero')."""
    x = jnp.transpose(x_nchw, (0, 2, 3, 1)).astype(jnp.float32)   # NHWC

    def conv(xin, w, b):
        y = jax.lax.conv_general_dilated(
            xin, w, window_strides=(1, 1), padding="SAME",
            dimension_numbers=("NHWC", "HWIO", "NHWC"))
        return y + b.reshape(1, 1, 1, -1)

    def inorm(y):
        mu = jnp.mean(y, axis=(1, 2), keepdims=True)
        yc = y - mu
        var = jnp.mean(yc * yc, axis=(1, 2), keepdims=True)
        return yc * jax.lax.rsqrt(var + EPS)

    def style(y, sw, sb):
        st = latent @ sw + sb                                  # (B, 2C)
        Cc = y.shape[-1]
        scale = st[:, :Cc].reshape(-1, 1, 1, Cc)
        shift = st[:, Cc:].reshape(-1, 1, 1, Cc)
        return y * (scale + 1.0) + shift

    y = conv(x, params["w1"], params["b1"])
    y = inorm(y)
    y = style(y, params["sw1"], params["sb1"])
    y = jnp.maximum(y, 0.0)
    y = conv(y, params["w2"], params["b2"])
    y = inorm(y)
    y = style(y, params["sw2"], params["sb2"])
    out = x + y
    return jnp.transpose(out, (0, 3, 1, 2))


if __name__ == "__main__":
    B, C, H, W, L = 2, 16, 16, 16, 8          # dim=16, latent_size=8, 16x16 spatial

    key = jax.random.PRNGKey(0)
    kx, kl, kp = jax.random.split(key, 3)
    x = jax.random.normal(kx, (B, C, H, W), jnp.float32)       # NCHW like PyTorch
    latent = jax.random.normal(kl, (B, L), jnp.float32)
    params = init_params(kp, C, L)

    out = jax.block_until_ready(resnet_block_adain(x, latent, params))
    ref = reference_forward(x, latent, params)

    assert out.shape == (B, C, H, W), out.shape
    max_err = float(jnp.max(jnp.abs(out - ref)))
    # Tolerance accounts for bf16 MXU operands in the kernel vs the pure-f32 reference
    # (InstanceNorm / AdaIN / residual are f32 in both; observed error is ~1e-2 worst case).
    if not jnp.allclose(out, ref, atol=5e-2, rtol=5e-2):
        raise AssertionError(f"Pallas kernel mismatch vs reference, max abs err = {max_err}")

    print("KERNEL_OK")
</pallas_src>

<mosaic_0001>
module attributes {stable_mosaic.version = 11 : i64} {
  func.func @_resblock_adain_kernel(%arg0: i32, %arg1: memref<1x16x256xf32, #tpu.memory_space<vmem>>, %arg2: memref<1x32x1xf32, #tpu.memory_space<vmem>>, %arg3: memref<1x32x1xf32, #tpu.memory_space<vmem>>, %arg4: memref<16x144xbf16, #tpu.memory_space<vmem>>, %arg5: memref<16x1xf32, #tpu.memory_space<vmem>>, %arg6: memref<16x144xbf16, #tpu.memory_space<vmem>>, %arg7: memref<16x1xf32, #tpu.memory_space<vmem>>, %arg8: memref<1x16x256xf32, #tpu.memory_space<vmem>>, %arg9: memref<144x256xbf16, #tpu.memory_space<vmem>>) attributes {dimension_semantics = [#tpu.dimension_semantics<parallel>], iteration_bounds = array<i64: 2>, scalar_prefetch = 0 : i64, scratch_operands = 1 : i64, tpu.core_type = #tpu.core_type<tc>, window_params = [{transform_indices = @transform_0, window_bounds = array<i64: 1, 16, 256>}, {transform_indices = @transform_1, window_bounds = array<i64: 1, 32, 1>}, {transform_indices = @transform_2, window_bounds = array<i64: 1, 32, 1>}, {pipeline_mode = #tpu.pipeline_mode<synchronous>, transform_indices = @transform_3, window_bounds = array<i64: 16, 144>}, {pipeline_mode = #tpu.pipeline_mode<synchronous>, transform_indices = @transform_4, window_bounds = array<i64: 16, 1>}, {pipeline_mode = #tpu.pipeline_mode<synchronous>, transform_indices = @transform_5, window_bounds = array<i64: 16, 144>}, {pipeline_mode = #tpu.pipeline_mode<synchronous>, transform_indices = @transform_6, window_bounds = array<i64: 16, 1>}, {transform_indices = @transform_7, window_bounds = array<i64: 1, 16, 256>}]} {
    %c0 = arith.constant 0 : index
    %c0_0 = arith.constant 0 : index
    %c0_1 = arith.constant 0 : index
    %0 = vector.load %arg1[%c0, %c0_0, %c0_1] : memref<1x16x256xf32, #tpu.memory_space<vmem>>, vector<1x16x256xf32>
    %1 = vector.shape_cast %0 : vector<1x16x256xf32> to vector<16x256xf32>
    %2 = tpu.iota {dimensions = array<i32: 1>} : vector<1x256xi32>
    %c16_i32 = arith.constant 16 : i32
    %c0_i32 = arith.constant 0 : i32
    %3 = arith.cmpi eq, %c16_i32, %c0_i32 : i32
    %c1_i32 = arith.constant 1 : i32
    %4 = arith.select %3, %c1_i32, %c16_i32 : i32
    %5 = vector.broadcast %4 : i32 to vector<1x256xi32>
    %6 = arith.remsi %2, %5 : vector<1x256xi32>
    %c0_i32_2 = arith.constant 0 : i32
    %7 = vector.broadcast %c0_i32_2 : i32 to vector<1x256xi32>
    %8 = arith.cmpi ne, %6, %7 : vector<1x256xi32>
    %c0_i32_3 = arith.constant 0 : i32
    %9 = vector.broadcast %c0_i32_3 : i32 to vector<1x256xi32>
    %10 = arith.cmpi slt, %6, %9 : vector<1x256xi32>
    %c0_i32_4 = arith.constant 0 : i32
    %11 = arith.cmpi slt, %4, %c0_i32_4 : i32
    %12 = vector.broadcast %11 : i1 to vector<1x256xi1>
    %13 = vector.broadcast %12 : vector<1x256xi1> to vector<1x256xi1>
    %14 = arith.xori %10, %13 : vector<1x256xi1>
    %15 = arith.andi %14, %8 : vector<1x256xi1>
    %16 = vector.broadcast %4 : i32 to vector<1x256xi32>
    %17 = arith.addi %6, %16 : vector<1x256xi32>
    %18 = arith.select %15, %17, %6 : vector<1x256xi1>, vector<1x256xi32>
    %c0_i32_5 = arith.constant 0 : i32
    %19 = vector.broadcast %c0_i32_5 : i32 to vector<1x256xi32>
    %20 = arith.cmpi sgt, %18, %19 : vector<1x256xi32>
    %c15_i32 = arith.constant 15 : i32
    %21 = vector.broadcast %c15_i32 : i32 to vector<1x256xi32>
    %22 = arith.cmpi slt, %18, %21 : vector<1x256xi32>
    %23 = arith.truncf %1 : vector<16x256xf32> to vector<16x256xbf16>
    %cst = arith.constant 0.000000e+00 : bf16
    %24 = vector.broadcast %cst : bf16 to vector<16x17xbf16>
    %25 = vector.extract_strided_slice %23 {offsets = [0, 0], sizes = [16, 239], strides = [1, 1]} : vector<16x256xbf16> to vector<16x239xbf16>
    %26 = tpu.concatenate %24, %25 in 1 : vector<16x17xbf16>, vector<16x239xbf16> -> vector<16x256xbf16>
    %cst_6 = arith.constant 0.000000e+00 : f32
    %27 = arith.truncf %cst_6 : f32 to bf16
    %28 = vector.shape_cast %20 : vector<1x256xi1> to vector<1x256xi1>
    %29 = vector.broadcast %28 : vector<1x256xi1> to vector<16x256xi1>
    %30 = vector.broadcast %27 : bf16 to vector<16x256xbf16>
    %31 = arith.select %29, %26, %30 : vector<16x256xi1>, vector<16x256xbf16>
    %c0_7 = arith.constant 0 : index
    %c0_8 = arith.constant 0 : index
    %32 = vector.load %arg9[%c0_7, %c0_8] : memref<144x256xbf16, #tpu.memory_space<vmem>>, vector<16x256xbf16>
    tpu.vector_store %arg9[%c0_7, %c0_8], %31 {strides = array<i32>} : memref<144x256xbf16, #tpu.memory_space<vmem>>, vector<16x256xbf16>,
    %cst_9 = arith.constant 0.000000e+00 : bf16
    %33 = vector.broadcast %cst_9 : bf16 to vector<16x16xbf16>
    %34 = vector.extract_strided_slice %23 {offsets = [0, 0], sizes = [16, 240], strides = [1, 1]} : vector<16x256xbf16> to vector<16x240xbf16>
    %35 = tpu.concatenate %33, %34 in 1 : vector<16x16xbf16>, vector<16x240xbf16> -> vector<16x256xbf16>
    %c16 = arith.constant 16 : index
    %c0_10 = arith.constant 0 : index
    %36 = vector.load %arg9[%c16, %c0_10] : memref<144x256xbf16, #tpu.memory_space<vmem>>, vector<16x256xbf16>
    tpu.vector_store %arg9[%c16, %c0_10], %35 {strides = array<i32>} : memref<144x256xbf16, #tpu.memory_space<vmem>>, vector<16x256xbf16>,
    %cst_11 = arith.constant 0.000000e+00 : bf16
    %37 = vector.broadcast %cst_11 : bf16 to vector<16x15xbf16>
    %38 = vector.extract_strided_slice %23 {offsets = [0, 0], sizes = [16, 241], strides = [1, 1]} : vector<16x256xbf16> to vector<16x241xbf16>
    %39 = tpu.concatenate %37, %38 in 1 : vector<16x15xbf16>, vector<16x241xbf16> -> vector<16x256xbf16>
    %cst_12 = arith.constant 0.000000e+00 : f32
    %40 = arith.truncf %cst_12 : f32 to bf16
    %41 = vector.shape_cast %22 : vector<1x256xi1> to vector<1x256xi1>
    %42 = vector.broadcast %41 : vector<1x256xi1> to vector<16x256xi1>
    %43 = vector.broadcast %40 : bf16 to vector<16x256xbf16>
    %44 = arith.select %42, %39, %43 : vector<16x256xi1>, vector<16x256xbf16>
    %c32 = arith.constant 32 : index
    %c0_13 = arith.constant 0 : index
    %45 = vector.load %arg9[%c32, %c0_13] : memref<144x256xbf16, #tpu.memory_space<vmem>>, vector<16x256xbf16>
    tpu.vector_store %arg9[%c32, %c0_13], %44 {strides = array<i32>} : memref<144x256xbf16, #tpu.memory_space<vmem>>, vector<16x256xbf16>,
    %cst_14 = arith.constant 0.000000e+00 : bf16
    %46 = vector.broadcast %cst_14 : bf16 to vector<16x1xbf16>
    %47 = vector.extract_strided_slice %23 {offsets = [0, 0], sizes = [16, 255], strides = [1, 1]} : vector<16x256xbf16> to vector<16x255xbf16>
    %48 = tpu.concatenate %46, %47 in 1 : vector<16x1xbf16>, vector<16x255xbf16> -> vector<16x256xbf16>
    %cst_15 = arith.constant 0.000000e+00 : f32
    %49 = arith.truncf %cst_15 : f32 to bf16
    %50 = vector.shape_cast %20 : vector<1x256xi1> to vector<1x256xi1>
    %51 = vector.broadcast %50 : vector<1x256xi1> to vector<16x256xi1>
    %52 = vector.broadcast %49 : bf16 to vector<16x256xbf16>
    %53 = arith.select %51, %48, %52 : vector<16x256xi1>, vector<16x256xbf16>
    %c48 = arith.constant 48 : index
    %c0_16 = arith.constant 0 : index
    %54 = vector.load %arg9[%c48, %c0_16] : memref<144x256xbf16, #tpu.memory_space<vmem>>, vector<16x256xbf16>
    tpu.vector_store %arg9[%c48, %c0_16], %53 {strides = array<i32>} : memref<144x256xbf16, #tpu.memory_space<vmem>>, vector<16x256xbf16>,
    %c64 = arith.constant 64 : index
    %c0_17 = arith.constant 0 : index
    %55 = vector.load %arg9[%c64, %c0_17] : memref<144x256xbf16, #tpu.memory_space<vmem>>, vector<16x256xbf16>
    tpu.vector_store %arg9[%c64, %c0_17], %23 {strides = array<i32>} : memref<144x256xbf16, #tpu.memory_space<vmem>>, vector<16x256xbf16>,
    %56 = vector.extract_strided_slice %23 {offsets = [0, 1], sizes = [16, 255], strides = [1, 1]} : vector<16x256xbf16> to vector<16x255xbf16>
    %cst_18 = arith.constant 0.000000e+00 : bf16
    %57 = vector.broadcast %cst_18 : bf16 to vector<16x1xbf16>
    %58 = tpu.concatenate %56, %57 in 1 : vector<16x255xbf16>, vector<16x1xbf16> -> vector<16x256xbf16>
    %cst_19 = arith.constant 0.000000e+00 : f32
    %59 = arith.truncf %cst_19 : f32 to bf16
    %60 = vector.shape_cast %22 : vector<1x256xi1> to vector<1x256xi1>
    %61 = vector.broadcast %60 : vector<1x256xi1> to vector<16x256xi1>
    %62 = vector.broadcast %59 : bf16 to vector<16x256xbf16>
    %63 = arith.select %61, %58, %62 : vector<16x256xi1>, vector<16x256xbf16>
    %c80 = arith.constant 80 : index
    %c0_20 = arith.constant 0 : index
    %64 = vector.load %arg9[%c80, %c0_20] : memref<144x256xbf16, #tpu.memory_space<vmem>>, vector<16x256xbf16>
    tpu.vector_store %arg9[%c80, %c0_20], %63 {strides = array<i32>} : memref<144x256xbf16, #tpu.memory_space<vmem>>, vector<16x256xbf16>,
    %65 = vector.extract_strided_slice %23 {offsets = [0, 15], sizes = [16, 241], strides = [1, 1]} : vector<16x256xbf16> to vector<16x241xbf16>
    %cst_21 = arith.constant 0.000000e+00 : bf16
    %66 = vector.broadcast %cst_21 : bf16 to vector<16x15xbf16>
    %67 = tpu.concatenate %65, %66 in 1 : vector<16x241xbf16>, vector<16x15xbf16> -> vector<16x256xbf16>
    %cst_22 = arith.constant 0.000000e+00 : f32
    %68 = arith.truncf %cst_22 : f32 to bf16
    %69 = vector.shape_cast %20 : vector<1x256xi1> to vector<1x256xi1>
    %70 = vector.broadcast %69 : vector<1x256xi1> to vector<16x256xi1>
    %71 = vector.broadcast %68 : bf16 to vector<16x256xbf16>
    %72 = arith.select %70, %67, %71 : vector<16x256xi1>, vector<16x256xbf16>
    %c96 = arith.constant 96 : index
    %c0_23 = arith.constant 0 : index
    %73 = vector.load %arg9[%c96, %c0_23] : memref<144x256xbf16, #tpu.memory_space<vmem>>, vector<16x256xbf16>
    tpu.vector_store %arg9[%c96, %c0_23], %72 {strides = array<i32>} : memref<144x256xbf16, #tpu.memory_space<vmem>>, vector<16x256xbf16>,
    %74 = vector.extract_strided_slice %23 {offsets = [0, 16], sizes = [16, 240], strides = [1, 1]} : vector<16x256xbf16> to vector<16x240xbf16>
    %cst_24 = arith.constant 0.000000e+00 : bf16
    %75 = vector.broadcast %cst_24 : bf16 to vector<16x16xbf16>
    %76 = tpu.concatenate %74, %75 in 1 : vector<16x240xbf16>, vector<16x16xbf16> -> vector<16x256xbf16>
    %c112 = arith.constant 112 : index
    %c0_25 = arith.constant 0 : index
    %77 = vector.load %arg9[%c112, %c0_25] : memref<144x256xbf16, #tpu.memory_space<vmem>>, vector<16x256xbf16>
    tpu.vector_store %arg9[%c112, %c0_25], %76 {strides = array<i32>} : memref<144x256xbf16, #tpu.memory_space<vmem>>, vector<16x256xbf16>,
    %78 = vector.extract_strided_slice %23 {offsets = [0, 17], sizes = [16, 239], strides = [1, 1]} : vector<16x256xbf16> to vector<16x239xbf16>
    %cst_26 = arith.constant 0.000000e+00 : bf16
    %79 = vector.broadcast %cst_26 : bf16 to vector<16x17xbf16>
    %80 = tpu.concatenate %78, %79 in 1 : vector<16x239xbf16>, vector<16x17xbf16> -> vector<16x256xbf16>
    %cst_27 = arith.constant 0.000000e+00 : f32
    %81 = arith.truncf %cst_27 : f32 to bf16
    %82 = vector.shape_cast %22 : vector<1x256xi1> to vector<1x256xi1>
    %83 = vector.broadcast %82 : vector<1x256xi1> to vector<16x256xi1>
    %84 = vector.broadcast %81 : bf16 to vector<16x256xbf16>
    %85 = arith.select %83, %80, %84 : vector<16x256xi1>, vector<16x256xbf16>
    %c128 = arith.constant 128 : index
    %c0_28 = arith.constant 0 : index
    %86 = vector.load %arg9[%c128, %c0_28] : memref<144x256xbf16, #tpu.memory_space<vmem>>, vector<16x256xbf16>
    tpu.vector_store %arg9[%c128, %c0_28], %85 {strides = array<i32>} : memref<144x256xbf16, #tpu.memory_space<vmem>>, vector<16x256xbf16>,
    %c0_29 = arith.constant 0 : index
    %c0_30 = arith.constant 0 : index
    %87 = vector.load %arg4[%c0_29, %c0_30] : memref<16x144xbf16, #tpu.memory_space<vmem>>, vector<16x144xbf16>
    %c0_31 = arith.constant 0 : index
    %c0_32 = arith.constant 0 : index
    %88 = vector.load %arg9[%c0_31, %c0_32] : memref<144x256xbf16, #tpu.memory_space<vmem>>, vector<144x256xbf16>
    %cst_33 = arith.constant dense<0.000000e+00> : vector<16x256xf32>
    %89 = tpu.matmul %87, %88, %cst_33 {dimension_numbers = #tpu.dot_dimension_numbers<[1], [0], [0], [1], [0, 0, 1, 1], [], []>} : vector<16x144xbf16>, vector<144x256xbf16>, vector<16x256xf32> -> vector<16x256xf32>
    %c0_34 = arith.constant 0 : index
    %c0_35 = arith.constant 0 : index
    %90 = vector.load %arg5[%c0_34, %c0_35] : memref<16x1xf32, #tpu.memory_space<vmem>>, vector<16x1xf32>
    %91 = vector.broadcast %90 : vector<16x1xf32> to vector<16x256xf32>
    %92 = arith.addf %89, %91 : vector<16x256xf32>
    %cst_36 = arith.constant dense<0.000000e+00> : vector<16xf32>
    %93 = vector.multi_reduction <add>, %92, %cst_36 [1] : vector<16x256xf32> to vector<16xf32>
    %94 = vector.shape_cast %93 : vector<16xf32> to vector<16x1xf32>
    %cst_37 = arith.constant 2.560000e+02 : f32
    %95 = vector.broadcast %cst_37 : f32 to vector<16x1xf32>
    %96 = arith.divf %94, %95 : vector<16x1xf32>
    %97 = vector.broadcast %96 : vector<16x1xf32> to vector<16x256xf32>
    %98 = arith.subf %92, %97 : vector<16x256xf32>
    %99 = arith.mulf %98, %98 : vector<16x256xf32>
    %cst_38 = arith.constant dense<0.000000e+00> : vector<16xf32>
    %100 = vector.multi_reduction <add>, %99, %cst_38 [1] : vector<16x256xf32> to vector<16xf32>
    %101 = vector.shape_cast %100 : vector<16xf32> to vector<16x1xf32>
    %cst_39 = arith.constant 2.560000e+02 : f32
    %102 = vector.broadcast %cst_39 : f32 to vector<16x1xf32>
    %103 = arith.divf %101, %102 : vector<16x1xf32>
    %cst_40 = arith.constant 9.99999993E-9 : f32
    %104 = vector.broadcast %cst_40 : f32 to vector<16x1xf32>
    %105 = arith.addf %103, %104 : vector<16x1xf32>
    %106 = math.rsqrt %105 : vector<16x1xf32>
    %107 = vector.broadcast %106 : vector<16x1xf32> to vector<16x256xf32>
    %108 = arith.mulf %98, %107 : vector<16x256xf32>
    %c0_41 = arith.constant 0 : index
    %c0_42 = arith.constant 0 : index
    %c0_43 = arith.constant 0 : index
    %109 = vector.load %arg2[%c0_41, %c0_42, %c0_43] : memref<1x32x1xf32, #tpu.memory_space<vmem>>, vector<1x32x1xf32>
    %110 = vector.shape_cast %109 : vector<1x32x1xf32> to vector<32x1xf32>
    %111 = vector.extract_strided_slice %110 {offsets = [0, 0], sizes = [16, 1], strides = [1, 1]} : vector<32x1xf32> to vector<16x1xf32>
    %cst_44 = arith.constant 1.000000e+00 : f32
    %112 = vector.broadcast %cst_44 : f32 to vector<16x1xf32>
    %113 = arith.addf %111, %112 : vector<16x1xf32>
    %114 = vector.broadcast %113 : vector<16x1xf32> to vector<16x256xf32>
    %115 = arith.mulf %108, %114 : vector<16x256xf32>
    %116 = vector.extract_strided_slice %110 {offsets = [16, 0], sizes = [16, 1], strides = [1, 1]} : vector<32x1xf32> to vector<16x1xf32>
    %117 = vector.broadcast %116 : vector<16x1xf32> to vector<16x256xf32>
    %118 = arith.addf %115, %117 : vector<16x256xf32>
    %cst_45 = arith.constant 0.000000e+00 : f32
    %119 = vector.broadcast %cst_45 : f32 to vector<16x256xf32>
    %120 = arith.maximumf %118, %119 : vector<16x256xf32>
    %121 = arith.truncf %120 : vector<16x256xf32> to vector<16x256xbf16>
    %cst_46 = arith.constant 0.000000e+00 : bf16
    %122 = vector.broadcast %cst_46 : bf16 to vector<16x17xbf16>
    %123 = vector.extract_strided_slice %121 {offsets = [0, 0], sizes = [16, 239], strides = [1, 1]} : vector<16x256xbf16> to vector<16x239xbf16>
    %124 = tpu.concatenate %122, %123 in 1 : vector<16x17xbf16>, vector<16x239xbf16> -> vector<16x256xbf16>
    %cst_47 = arith.constant 0.000000e+00 : f32
    %125 = arith.truncf %cst_47 : f32 to bf16
    %126 = vector.shape_cast %20 : vector<1x256xi1> to vector<1x256xi1>
    %127 = vector.broadcast %126 : vector<1x256xi1> to vector<16x256xi1>
    %128 = vector.broadcast %125 : bf16 to vector<16x256xbf16>
    %129 = arith.select %127, %124, %128 : vector<16x256xi1>, vector<16x256xbf16>
    %c0_48 = arith.constant 0 : index
    %c0_49 = arith.constant 0 : index
    %130 = vector.load %arg9[%c0_48, %c0_49] : memref<144x256xbf16, #tpu.memory_space<vmem>>, vector<16x256xbf16>
    tpu.vector_store %arg9[%c0_48, %c0_49], %129 {strides = array<i32>} : memref<144x256xbf16, #tpu.memory_space<vmem>>, vector<16x256xbf16>,
    %cst_50 = arith.constant 0.000000e+00 : bf16
    %131 = vector.broadcast %cst_50 : bf16 to vector<16x16xbf16>
    %132 = vector.extract_strided_slice %121 {offsets = [0, 0], sizes = [16, 240], strides = [1, 1]} : vector<16x256xbf16> to vector<16x240xbf16>
    %133 = tpu.concatenate %131, %132 in 1 : vector<16x16xbf16>, vector<16x240xbf16> -> vector<16x256xbf16>
    %c16_51 = arith.constant 16 : index
    %c0_52 = arith.constant 0 : index
    %134 = vector.load %arg9[%c16_51, %c0_52] : memref<144x256xbf16, #tpu.memory_space<vmem>>, vector<16x256xbf16>
    tpu.vector_store %arg9[%c16_51, %c0_52], %133 {strides = array<i32>} : memref<144x256xbf16, #tpu.memory_space<vmem>>, vector<16x256xbf16>,
    %cst_53 = arith.constant 0.000000e+00 : bf16
    %135 = vector.broadcast %cst_53 : bf16 to vector<16x15xbf16>
    %136 = vector.extract_strided_slice %121 {offsets = [0, 0], sizes = [16, 241], strides = [1, 1]} : vector<16x256xbf16> to vector<16x241xbf16>
    %137 = tpu.concatenate %135, %136 in 1 : vector<16x15xbf16>, vector<16x241xbf16> -> vector<16x256xbf16>
    %cst_54 = arith.constant 0.000000e+00 : f32
    %138 = arith.truncf %cst_54 : f32 to bf16
    %139 = vector.shape_cast %22 : vector<1x256xi1> to vector<1x256xi1>
    %140 = vector.broadcast %139 : vector<1x256xi1> to vector<16x256xi1>
    %141 = vector.broadcast %138 : bf16 to vector<16x256xbf16>
    %142 = arith.select %140, %137, %141 : vector<16x256xi1>, vector<16x256xbf16>
    %c32_55 = arith.constant 32 : index
    %c0_56 = arith.constant 0 : index
    %143 = vector.load %arg9[%c32_55, %c0_56] : memref<144x256xbf16, #tpu.memory_space<vmem>>, vector<16x256xbf16>
    tpu.vector_store %arg9[%c32_55, %c0_56], %142 {strides = array<i32>} : memref<144x256xbf16, #tpu.memory_space<vmem>>, vector<16x256xbf16>,
    %cst_57 = arith.constant 0.000000e+00 : bf16
    %144 = vector.broadcast %cst_57 : bf16 to vector<16x1xbf16>
    %145 = vector.extract_strided_slice %121 {offsets = [0, 0], sizes = [16, 255], strides = [1, 1]} : vector<16x256xbf16> to vector<16x255xbf16>
    %146 = tpu.concatenate %144, %145 in 1 : vector<16x1xbf16>, vector<16x255xbf16> -> vector<16x256xbf16>
    %cst_58 = arith.constant 0.000000e+00 : f32
    %147 = arith.truncf %cst_58 : f32 to bf16
    %148 = vector.shape_cast %20 : vector<1x256xi1> to vector<1x256xi1>
    %149 = vector.broadcast %148 : vector<1x256xi1> to vector<16x256xi1>
    %150 = vector.broadcast %147 : bf16 to vector<16x256xbf16>
    %151 = arith.select %149, %146, %150 : vector<16x256xi1>, vector<16x256xbf16>
    %c48_59 = arith.constant 48 : index
    %c0_60 = arith.constant 0 : index
    %152 = vector.load %arg9[%c48_59, %c0_60] : memref<144x256xbf16, #tpu.memory_space<vmem>>, vector<16x256xbf16>
    tpu.vector_store %arg9[%c48_59, %c0_60], %151 {strides = array<i32>} : memref<144x256xbf16, #tpu.memory_space<vmem>>, vector<16x256xbf16>,
    %c64_61 = arith.constant 64 : index
    %c0_62 = arith.constant 0 : index
    %153 = vector.load %arg9[%c64_61, %c0_62] : memref<144x256xbf16, #tpu.memory_space<vmem>>, vector<16x256xbf16>
    tpu.vector_store %arg9[%c64_61, %c0_62], %121 {strides = array<i32>} : memref<144x256xbf16, #tpu.memory_space<vmem>>, vector<16x256xbf16>,
    %154 = vector.extract_strided_slice %121 {offsets = [0, 1], sizes = [16, 255], strides = [1, 1]} : vector<16x256xbf16> to vector<16x255xbf16>
    %cst_63 = arith.constant 0.000000e+00 : bf16
    %155 = vector.broadcast %cst_63 : bf16 to vector<16x1xbf16>
    %156 = tpu.concatenate %154, %155 in 1 : vector<16x255xbf16>, vector<16x1xbf16> -> vector<16x256xbf16>
    %cst_64 = arith.constant 0.000000e+00 : f32
    %157 = arith.truncf %cst_64 : f32 to bf16
    %158 = vector.shape_cast %22 : vector<1x256xi1> to vector<1x256xi1>
    %159 = vector.broadcast %158 : vector<1x256xi1> to vector<16x256xi1>
    %160 = vector.broadcast %157 : bf16 to vector<16x256xbf16>
    %161 = arith.select %159, %156, %160 : vector<16x256xi1>, vector<16x256xbf16>
    %c80_65 = arith.constant 80 : index
    %c0_66 = arith.constant 0 : index
    %162 = vector.load %arg9[%c80_65, %c0_66] : memref<144x256xbf16, #tpu.memory_space<vmem>>, vector<16x256xbf16>
    tpu.vector_store %arg9[%c80_65, %c0_66], %161 {strides = array<i32>} : memref<144x256xbf16, #tpu.memory_space<vmem>>, vector<16x256xbf16>,
    %163 = vector.extract_strided_slice %121 {offsets = [0, 15], sizes = [16, 241], strides = [1, 1]} : vector<16x256xbf16> to vector<16x241xbf16>
    %cst_67 = arith.constant 0.000000e+00 : bf16
    %164 = vector.broadcast %cst_67 : bf16 to vector<16x15xbf16>
    %165 = tpu.concatenate %163, %164 in 1 : vector<16x241xbf16>, vector<16x15xbf16> -> vector<16x256xbf16>
    %cst_68 = arith.constant 0.000000e+00 : f32
    %166 = arith.truncf %cst_68 : f32 to bf16
    %167 = vector.shape_cast %20 : vector<1x256xi1> to vector<1x256xi1>
    %168 = vector.broadcast %167 : vector<1x256xi1> to vector<16x256xi1>
    %169 = vector.broadcast %166 : bf16 to vector<16x256xbf16>
    %170 = arith.select %168, %165, %169 : vector<16x256xi1>, vector<16x256xbf16>
    %c96_69 = arith.constant 96 : index
    %c0_70 = arith.constant 0 : index
    %171 = vector.load %arg9[%c96_69, %c0_70] : memref<144x256xbf16, #tpu.memory_space<vmem>>, vector<16x256xbf16>
    tpu.vector_store %arg9[%c96_69, %c0_70], %170 {strides = array<i32>} : memref<144x256xbf16, #tpu.memory_space<vmem>>, vector<16x256xbf16>,
    %172 = vector.extract_strided_slice %121 {offsets = [0, 16], sizes = [16, 240], strides = [1, 1]} : vector<16x256xbf16> to vector<16x240xbf16>
    %cst_71 = arith.constant 0.000000e+00 : bf16
    %173 = vector.broadcast %cst_71 : bf16 to vector<16x16xbf16>
    %174 = tpu.concatenate %172, %173 in 1 : vector<16x240xbf16>, vector<16x16xbf16> -> vector<16x256xbf16>
    %c112_72 = arith.constant 112 : index
    %c0_73 = arith.constant 0 : index
    %175 = vector.load %arg9[%c112_72, %c0_73] : memref<144x256xbf16, #tpu.memory_space<vmem>>, vector<16x256xbf16>
    tpu.vector_store %arg9[%c112_72, %c0_73], %174 {strides = array<i32>} : memref<144x256xbf16, #tpu.memory_space<vmem>>, vector<16x256xbf16>,
    %176 = vector.extract_strided_slice %121 {offsets = [0, 17], sizes = [16, 239], strides = [1, 1]} : vector<16x256xbf16> to vector<16x239xbf16>
    %cst_74 = arith.constant 0.000000e+00 : bf16
    %177 = vector.broadcast %cst_74 : bf16 to vector<16x17xbf16>
    %178 = tpu.concatenate %176, %177 in 1 : vector<16x239xbf16>, vector<16x17xbf16> -> vector<16x256xbf16>
    %cst_75 = arith.constant 0.000000e+00 : f32
    %179 = arith.truncf %cst_75 : f32 to bf16
    %180 = vector.shape_cast %22 : vector<1x256xi1> to vector<1x256xi1>
    %181 = vector.broadcast %180 : vector<1x256xi1> to vector<16x256xi1>
    %182 = vector.broadcast %179 : bf16 to vector<16x256xbf16>
    %183 = arith.select %181, %178, %182 : vector<16x256xi1>, vector<16x256xbf16>
    %c128_76 = arith.constant 128 : index
    %c0_77 = arith.constant 0 : index
    %184 = vector.load %arg9[%c128_76, %c0_77] : memref<144x256xbf16, #tpu.memory_space<vmem>>, vector<16x256xbf16>
    tpu.vector_store %arg9[%c128_76, %c0_77], %183 {strides = array<i32>} : memref<144x256xbf16, #tpu.memory_space<vmem>>, vector<16x256xbf16>,
    %c0_78 = arith.constant 0 : index
    %c0_79 = arith.constant 0 : index
    %185 = vector.load %arg6[%c0_78, %c0_79] : memref<16x144xbf16, #tpu.memory_space<vmem>>, vector<16x144xbf16>
    %c0_80 = arith.constant 0 : index
    %c0_81 = arith.constant 0 : index
    %186 = vector.load %arg9[%c0_80, %c0_81] : memref<144x256xbf16, #tpu.memory_space<vmem>>, vector<144x256xbf16>
    %cst_82 = arith.constant dense<0.000000e+00> : vector<16x256xf32>
    %187 = tpu.matmul %185, %186, %cst_82 {dimension_numbers = #tpu.dot_dimension_numbers<[1], [0], [0], [1], [0, 0, 1, 1], [], []>} : vector<16x144xbf16>, vector<144x256xbf16>, vector<16x256xf32> -> vector<16x256xf32>
    %c0_83 = arith.constant 0 : index
    %c0_84 = arith.constant 0 : index
    %188 = vector.load %arg7[%c0_83, %c0_84] : memref<16x1xf32, #tpu.memory_space<vmem>>, vector<16x1xf32>
    %189 = vector.broadcast %188 : vector<16x1xf32> to vector<16x256xf32>
    %190 = arith.addf %187, %189 : vector<16x256xf32>
    %cst_85 = arith.constant dense<0.000000e+00> : vector<16xf32>
    %191 = vector.multi_reduction <add>, %190, %cst_85 [1] : vector<16x256xf32> to vector<16xf32>
    %192 = vector.shape_cast %191 : vector<16xf32> to vector<16x1xf32>
    %cst_86 = arith.constant 2.560000e+02 : f32
    %193 = vector.broadcast %cst_86 : f32 to vector<16x1xf32>
    %194 = arith.divf %192, %193 : vector<16x1xf32>
    %195 = vector.broadcast %194 : vector<16x1xf32> to vector<16x256xf32>
    %196 = arith.subf %190, %195 : vector<16x256xf32>
    %197 = arith.mulf %196, %196 : vector<16x256xf32>
    %cst_87 = arith.constant dense<0.000000e+00> : vector<16xf32>
    %198 = vector.multi_reduction <add>, %197, %cst_87 [1] : vector<16x256xf32> to vector<16xf32>
    %199 = vector.shape_cast %198 : vector<16xf32> to vector<16x1xf32>
    %cst_88 = arith.constant 2.560000e+02 : f32
    %200 = vector.broadcast %cst_88 : f32 to vector<16x1xf32>
    %201 = arith.divf %199, %200 : vector<16x1xf32>
    %cst_89 = arith.constant 9.99999993E-9 : f32
    %202 = vector.broadcast %cst_89 : f32 to vector<16x1xf32>
    %203 = arith.addf %201, %202 : vector<16x1xf32>
    %204 = math.rsqrt %203 : vector<16x1xf32>
    %205 = vector.broadcast %204 : vector<16x1xf32> to vector<16x256xf32>
    %206 = arith.mulf %196, %205 : vector<16x256xf32>
    %c0_90 = arith.constant 0 : index
    %c0_91 = arith.constant 0 : index
    %c0_92 = arith.constant 0 : index
    %207 = vector.load %arg3[%c0_90, %c0_91, %c0_92] : memref<1x32x1xf32, #tpu.memory_space<vmem>>, vector<1x32x1xf32>
    %208 = vector.shape_cast %207 : vector<1x32x1xf32> to vector<32x1xf32>
    %209 = vector.extract_strided_slice %208 {offsets = [0, 0], sizes = [16, 1], strides = [1, 1]} : vector<32x1xf32> to vector<16x1xf32>
    %cst_93 = arith.constant 1.000000e+00 : f32
    %210 = vector.broadcast %cst_93 : f32 to vector<16x1xf32>
    %211 = arith.addf %209, %210 : vector<16x1xf32>
    %212 = vector.broadcast %211 : vector<16x1xf32> to vector<16x256xf32>
    %213 = arith.mulf %206, %212 : vector<16x256xf32>
    %214 = vector.extract_strided_slice %208 {offsets = [16, 0], sizes = [16, 1], strides = [1, 1]} : vector<32x1xf32> to vector<16x1xf32>
    %215 = vector.broadcast %214 : vector<16x1xf32> to vector<16x256xf32>
    %216 = arith.addf %213, %215 : vector<16x256xf32>
    %217 = arith.addf %1, %216 : vector<16x256xf32>
    %c0_94 = arith.constant 0 : index
    %c0_95 = arith.constant 0 : index
    %c0_96 = arith.constant 0 : index
    %218 = vector.load %arg8[%c0_94, %c0_95, %c0_96] : memref<1x16x256xf32, #tpu.memory_space<vmem>>, vector<1x16x256xf32>
    %219 = vector.shape_cast %218 : vector<1x16x256xf32> to vector<16x256xf32>
    %220 = vector.shape_cast %217 : vector<16x256xf32> to vector<1x16x256xf32>
    tpu.vector_store %arg8[%c0_94, %c0_95, %c0_96], %220 {strides = array<i32>} : memref<1x16x256xf32, #tpu.memory_space<vmem>>, vector<1x16x256xf32>,
    return
  }
  func.func @transform_0(%arg0: i32) -> (i32, i32, i32) {
    %c0_i32 = arith.constant 0 : i32
    %c0_i32_0 = arith.constant 0 : i32
    %c0_i32_1 = arith.constant 0 : i32
    return %arg0, %c0_i32, %c0_i32_0 : i32, i32, i32
  }
  func.func @transform_1(%arg0: i32) -> (i32, i32, i32) {
    %c0_i32 = arith.constant 0 : i32
    %c0_i32_0 = arith.constant 0 : i32
    %c0_i32_1 = arith.constant 0 : i32
    return %arg0, %c0_i32, %c0_i32_0 : i32, i32, i32
  }
  func.func @transform_2(%arg0: i32) -> (i32, i32, i32) {
    %c0_i32 = arith.constant 0 : i32
    %c0_i32_0 = arith.constant 0 : i32
    %c0_i32_1 = arith.constant 0 : i32
    return %arg0, %c0_i32, %c0_i32_0 : i32, i32, i32
  }
  func.func @transform_3(%arg0: i32) -> (i32, i32) {
    %c0_i32 = arith.constant 0 : i32
    %c0_i32_0 = arith.constant 0 : i32
    %c0_i32_1 = arith.constant 0 : i32
    return %c0_i32, %c0_i32_0 : i32, i32
  }
  func.func @transform_4(%arg0: i32) -> (i32, i32) {
    %c0_i32 = arith.constant 0 : i32
    %c0_i32_0 = arith.constant 0 : i32
    %c0_i32_1 = arith.constant 0 : i32
    return %c0_i32, %c0_i32_0 : i32, i32
  }
  func.func @transform_5(%arg0: i32) -> (i32, i32) {
    %c0_i32 = arith.constant 0 : i32
    %c0_i32_0 = arith.constant 0 : i32
    %c0_i32_1 = arith.constant 0 : i32
    return %c0_i32, %c0_i32_0 : i32, i32
  }
  func.func @transform_6(%arg0: i32) -> (i32, i32) {
    %c0_i32 = arith.constant 0 : i32
    %c0_i32_0 = arith.constant 0 : i32
    %c0_i32_1 = arith.constant 0 : i32
    return %c0_i32, %c0_i32_0 : i32, i32
  }
  func.func @transform_7(%arg0: i32) -> (i32, i32, i32) {
    %c0_i32 = arith.constant 0 : i32
    %c0_i32_0 = arith.constant 0 : i32
    %c0_i32_1 = arith.constant 0 : i32
    return %arg0, %c0_i32, %c0_i32_0 : i32, i32, i32
  }
}

</mosaic_0001>

<llo_original>
// kernel: tpu_custom_call.1
$region0: #{tpu_custom_call.1}
  #allocation0 [shape = 'u32[]', space=smem, size = 0x4, offset = 0x4, fixed_abs, tag = 'smem constant byte address 0x4 - core index']
  #allocation1 [shape = 'u32[144,128]{1,0:T(1,128)}', space=vmem, size = 0x12000, scoped, tag = 'internal scratch']
  #allocation2 [shape = 'bf16[144,256]{1,0:T(16,128)(2,1)}', space=vmem, size = 0x12000, scoped, tag = 'scratch operand']
  %s0 = inlined_call_operand.vmem [shape: f32[2,16,256], index: 0, kind: input, shape index: {}]
  %s1 = inlined_call_operand.vmem [shape: f32[2,32,1], index: 1, kind: input, shape index: {}]
  %s2 = inlined_call_operand.vmem [shape: f32[2,32,1], index: 2, kind: input, shape index: {}]
  %s3 = inlined_call_operand.vmem [shape: bf16[16,144], index: 3, kind: input, shape index: {}]
  %s4 = inlined_call_operand.vmem [shape: f32[16,1], index: 4, kind: input, shape index: {}]
  %s5 = inlined_call_operand.vmem [shape: bf16[16,144], index: 5, kind: input, shape index: {}]
  %s6 = inlined_call_operand.vmem [shape: f32[16,1], index: 6, kind: input, shape index: {}]
  %s7 = inlined_call_operand.hbm [shape: f32[2,16,256], index: 7, kind: output, shape index: {}]
  %s8 = sld [smem:[#allocation0]]
  $region61: #{tpu_custom_call.1} parent=0
    _
  %s10 = ssub.s32 1, %s8
  %s11 = scalar_select 0, %s10, %s8
  $region1: #{tpu_custom_call.1} parent=0
    #allocation3 [shape = 'u8[32768]{0}', space=vmem, size = 0x8000, scoped, tag = 'output window, operand 0']
    #allocation4 [shape = 's32[2]{0}', space=sflag, size = 0x8, scoped, tag = 'scoped memory for tpu_custom_call.1']
    %12 = vsyncpa [#allocation4], 0
    %s13 = scalar_lea.sflag [#allocation4], 1
    %14 = vsyncpa %s13, 0
    loop: start=0, step=1, limit=4
    $region2: #{tpu_custom_call.1} parent=1 // loop_pre_header
      _
    $region3: #{tpu_custom_call.1} parent=1 // loop_header
      %s16 = sphi 0, %s20
      %p17 = scmp.ge.s32.totalorder %s16, 4
      %s26 = sphi 0, %s28
      %s29 = sphi 0, %s26
      %s30 = sphi 0, %s29
      %s46 = sphi 0, %s30
      %s52 = sphi 0, %s54
      %s55 = sphi 0, %s52
      %s56 = sphi 0, %s55
      %s72 = sphi 0, %s56
      %s78 = sphi 0, %s80
      %s81 = sphi 0, %s78
      %s82 = sphi 0, %s81
      %s98 = sphi 0, %s82
      %s102 = sphi 0, %s102
      %s104 = sphi 0, %s102
      %s105 = sphi 0, %s104
      %s119 = sphi 0, %s105
      %s123 = sphi 0, %s123
      %s125 = sphi 0, %s123
      %s126 = sphi 0, %s125
      %s140 = sphi 0, %s126
      %s144 = sphi 0, %s144
      %s146 = sphi 0, %s144
      %s147 = sphi 0, %s146
      %s161 = sphi 0, %s147
      %s165 = sphi 0, %s165
      %s167 = sphi 0, %s165
      %s168 = sphi 0, %s167
      %s182 = sphi 0, %s168
      %s188 = sphi 0, %s190
      %s191 = sphi 0, %s188
      %s192 = sphi 0, %s191
      %s208 = sphi 0, %s192
    $region4: #{tpu_custom_call.1} parent=1 // loop_header_branch
      %19 = sbr.rel (%p17) target = $region8
    $region5: #{tpu_custom_call.1} parent=1 // loop_body
      %s21 = ssub.s32 %s16, 1
      %s22 = ssub.s32 %s16, 2
      %s23 = sadd.s32 %s16, 1
      %s24 = ssub.s32 %s16, %s23
      %p25 = scmp.eq.s32.totalorder %s24, 0
      %s27 = sadd.s32 %s26, 1
      %s28 = scalar_select %p25, %s26, %s27
      %p31 = pneg %p25
      %p32 = scmp.eq.s32.totalorder %s16, 1
      %p33 = por %p31, %p32
      %p34 = scmp.ne.s32.totalorder %s26, %s29
      %p35 = scmp.eq.s32.totalorder %s16, 0
      %p36 = por %p34, %p35
      %p37 = scmp.ne.s32.totalorder %s26, %s29
      %p38 = scmp.eq.s32.totalorder %s21, 1
      %p39 = por %p37, %p38
      %p40 = scmp.ne.s32.totalorder %s29, %s30
      %p41 = scmp.eq.s32.totalorder %s21, 0
      %p42 = por %p40, %p41
      %p43 = scmp.ne.s32.totalorder %s29, %s30
      %p44 = scmp.eq.s32.totalorder %s22, 1
      %p45 = por %p43, %p44
      %p47 = scmp.ne.s32.totalorder %s30, %s46
      %p48 = scmp.eq.s32.totalorder %s22, 0
      %p49 = por %p47, %p48
      %s50 = ssub.s32 %s16, %s23
      %p51 = scmp.eq.s32.totalorder %s50, 0
      %s53 = sadd.s32 %s52, 1
      %s54 = scalar_select %p51, %s52, %s53
      %p57 = pneg %p51
      %p58 = scmp.eq.s32.totalorder %s16, 1
      %p59 = por %p57, %p58
      %p60 = scmp.ne.s32.totalorder %s52, %s55
      %p61 = scmp.eq.s32.totalorder %s16, 0
      %p62 = por %p60, %p61
      %p63 = scmp.ne.s32.totalorder %s52, %s55
      %p64 = scmp.eq.s32.totalorder %s21, 1
      %p65 = por %p63, %p64
      %p66 = scmp.ne.s32.totalorder %s55, %s56
      %p67 = scmp.eq.s32.totalorder %s21, 0
      %p68 = por %p66, %p67
      %p69 = scmp.ne.s32.totalorder %s55, %s56
      %p70 = scmp.eq.s32.totalorder %s22, 1
      %p71 = por %p69, %p70
      %p73 = scmp.ne.s32.totalorder %s56, %s72
      %p74 = scmp.eq.s32.totalorder %s22, 0
      %p75 = por %p73, %p74
      %s76 = ssub.s32 %s16, %s23
      %p77 = scmp.eq.s32.totalorder %s76, 0
      %s79 = sadd.s32 %s78, 1
      %s80 = scalar_select %p77, %s78, %s79
      %p83 = pneg %p77
      %p84 = scmp.eq.s32.totalorder %s16, 1
      %p85 = por %p83, %p84
      %p86 = scmp.ne.s32.totalorder %s78, %s81
      %p87 = scmp.eq.s32.totalorder %s16, 0
      %p88 = por %p86, %p87
      %p89 = scmp.ne.s32.totalorder %s78, %s81
      %p90 = scmp.eq.s32.totalorder %s21, 1
      %p91 = por %p89, %p90
      %p92 = scmp.ne.s32.totalorder %s81, %s82
      %p93 = scmp.eq.s32.totalorder %s21, 0
      %p94 = por %p92, %p93
      %p95 = scmp.ne.s32.totalorder %s81, %s82
      %p96 = scmp.eq.s32.totalorder %s22, 1
      %p97 = por %p95, %p96
      %p99 = scmp.ne.s32.totalorder %s82, %s98
      %p100 = scmp.eq.s32.totalorder %s22, 0
      %p101 = por %p99, %p100
      %s103 = sadd.s32 %s102, 1
      %p106 = scmp.eq.s32.totalorder %s16, 1
      %p107 = scmp.ne.s32.totalorder %s102, %s104
      %p108 = scmp.eq.s32.totalorder %s16, 0
      %p109 = por %p107, %p108
      %p110 = scmp.ne.s32.totalorder %s102, %s104
      %p111 = scmp.eq.s32.totalorder %s21, 1
      %p112 = por %p110, %p111
      %p113 = scmp.ne.s32.totalorder %s104, %s105
      %p114 = scmp.eq.s32.totalorder %s21, 0
      %p115 = por %p113, %p114
      %p116 = scmp.ne.s32.totalorder %s104, %s105
      %p117 = scmp.eq.s32.totalorder %s22, 1
      %p118 = por %p116, %p117
      %p120 = scmp.ne.s32.totalorder %s105, %s119
      %p121 = scmp.eq.s32.totalorder %s22, 0
      %p122 = por %p120, %p121
      %s124 = sadd.s32 %s123, 1
      %p127 = scmp.eq.s32.totalorder %s16, 1
      %p128 = scmp.ne.s32.totalorder %s123, %s125
      %p129 = scmp.eq.s32.totalorder %s16, 0
      %p130 = por %p128, %p129
      %p131 = scmp.ne.s32.totalorder %s123, %s125
      %p132 = scmp.eq.s32.totalorder %s21, 1
      %p133 = por %p131, %p132
      %p134 = scmp.ne.s32.totalorder %s125, %s126
      %p135 = scmp.eq.s32.totalorder %s21, 0
      %p136 = por %p134, %p135
      %p137 = scmp.ne.s32.totalorder %s125, %s126
      %p138 = scmp.eq.s32.totalorder %s22, 1
      %p139 = por %p137, %p138
      %p141 = scmp.ne.s32.totalorder %s126, %s140
      %p142 = scmp.eq.s32.totalorder %s22, 0
      %p143 = por %p141, %p142
      %s145 = sadd.s32 %s144, 1
      %p148 = scmp.eq.s32.totalorder %s16, 1
      %p149 = scmp.ne.s32.totalorder %s144, %s146
      %p150 = scmp.eq.s32.totalorder %s16, 0
      %p151 = por %p149, %p150
      %p152 = scmp.ne.s32.totalorder %s144, %s146
      %p153 = scmp.eq.s32.totalorder %s21, 1
      %p154 = por %p152, %p153
      %p155 = scmp.ne.s32.totalorder %s146, %s147
      %p156 = scmp.eq.s32.totalorder %s21, 0
      %p157 = por %p155, %p156
      %p158 = scmp.ne.s32.totalorder %s146, %s147
      %p159 = scmp.eq.s32.totalorder %s22, 1
      %p160 = por %p158, %p159
      %p162 = scmp.ne.s32.totalorder %s147, %s161
      %p163 = scmp.eq.s32.totalorder %s22, 0
      %p164 = por %p162, %p163
      %s166 = sadd.s32 %s165, 1
      %p169 = scmp.eq.s32.totalorder %s16, 1
      %p170 = scmp.ne.s32.totalorder %s165, %s167
      %p171 = scmp.eq.s32.totalorder %s16, 0
      %p172 = por %p170, %p171
      %p173 = scmp.ne.s32.totalorder %s165, %s167
      %p174 = scmp.eq.s32.totalorder %s21, 1
      %p175 = por %p173, %p174
      %p176 = scmp.ne.s32.totalorder %s167, %s168
      %p177 = scmp.eq.s32.totalorder %s21, 0
      %p178 = por %p176, %p177
      %p179 = scmp.ne.s32.totalorder %s167, %s168
      %p180 = scmp.eq.s32.totalorder %s22, 1
      %p181 = por %p179, %p180
      %p183 = scmp.ne.s32.totalorder %s168, %s182
      %p184 = scmp.eq.s32.totalorder %s22, 0
      %p185 = por %p183, %p184
      %s186 = ssub.s32 %s16, %s23
      %p187 = scmp.eq.s32.totalorder %s186, 0
      %s189 = sadd.s32 %s188, 1
      %s190 = scalar_select %p187, %s188, %s189
      %p193 = pneg %p187
      %p194 = scmp.eq.s32.totalorder %s16, 1
      %p195 = por %p193, %p194
      %p196 = scmp.ne.s32.totalorder %s188, %s191
      %p197 = scmp.eq.s32.totalorder %s16, 0
      %p198 = por %p196, %p197
      %p199 = scmp.ne.s32.totalorder %s188, %s191
      %p200 = scmp.eq.s32.totalorder %s21, 1
      %p201 = por %p199, %p200
      %p202 = scmp.ne.s32.totalorder %s191, %s192
      %p203 = scmp.eq.s32.totalorder %s21, 0
      %p204 = por %p202, %p203
      %p205 = scmp.ne.s32.totalorder %s191, %s192
      %p206 = scmp.eq.s32.totalorder %s22, 1
      %p207 = por %p205, %p206
      %p209 = scmp.ne.s32.totalorder %s192, %s208
      %p210 = scmp.eq.s32.totalorder %s22, 0
      %p211 = por %p209, %p210
      %p212 = scmp.le.s32.totalorder 1, %s16
      %p213 = scmp.lt.s32.totalorder %s16, 3
      %p214 = pnand %p212, %p213
      %p215 = pneg %p214
      // Predicated region
      $region9: #{tpu_custom_call.1} parent=5 // pred_check
        _
      $region10: #{tpu_custom_call.1} parent=5 // pred_check_branch
        %217 = sbr.rel (%p214) target = $region12
      $region11: #{tpu_custom_call.1} parent=5 // pred_region
        %s218 = ssub.s32 %s16, 1
        // Predicated region
        $region13: #{tpu_custom_call.1} parent=11 // pred_check
          %p219 = pneg %p115
        $region14: #{tpu_custom_call.1} parent=11 // pred_check_branch
          %221 = sbr.rel (%p219) target = $region16
        $region15: #{tpu_custom_call.1} parent=11 // pred_region
          _
        $region16: #{tpu_custom_call.1} parent=11 // pred_fallthru
          _
        // Predicated region
        $region17: #{tpu_custom_call.1} parent=11 // pred_check
          %p222 = pneg %p136
        $region18: #{tpu_custom_call.1} parent=11 // pred_check_branch
          %224 = sbr.rel (%p222) target = $region20
        $region19: #{tpu_custom_call.1} parent=11 // pred_region
          _
        $region20: #{tpu_custom_call.1} parent=11 // pred_fallthru
          _
        // Predicated region
        $region21: #{tpu_custom_call.1} parent=11 // pred_check
          %p225 = pneg %p157
        $region22: #{tpu_custom_call.1} parent=11 // pred_check_branch
          %227 = sbr.rel (%p225) target = $region24
        $region23: #{tpu_custom_call.1} parent=11 // pred_region
          _
        $region24: #{tpu_custom_call.1} parent=11 // pred_fallthru
          _
        // Predicated region
        $region25: #{tpu_custom_call.1} parent=11 // pred_check
          %p228 = pneg %p178
        $region26: #{tpu_custom_call.1} parent=11 // pred_check_branch
          %230 = sbr.rel (%p228) target = $region28
        $region27: #{tpu_custom_call.1} parent=11 // pred_region
          _
        $region28: #{tpu_custom_call.1} parent=11 // pred_fallthru
          _
      $region12: #{tpu_custom_call.1} parent=5 // pred_fallthru
        _
      %p231 = scmp.lt.s32.totalorder %s16, 2
      // Predicated region
      $region29: #{tpu_custom_call.1} parent=5 // pred_check
        %p232 = pneg %p231
      $region30: #{tpu_custom_call.1} parent=5 // pred_check_branch
        %234 = sbr.rel (%p232) target = $region32
      $region31: #{tpu_custom_call.1} parent=5 // pred_region
        // Predicated region
        $region33: #{tpu_custom_call.1} parent=31 // pred_check
          %p235 = pneg %p36
        $region34: #{tpu_custom_call.1} parent=31 // pred_check_branch
          %237 = sbr.rel (%p235) target = $region36
        $region35: #{tpu_custom_call.1} parent=31 // pred_region
          %p238 = scmp.lt.s32.totalorder %s16, 1
          %s239 = scalar_select %p238, %s16, 1
          %s240 = smul.addr %s239, 4
          %s241 = smul.addr %s240, 8
          %s242 = scalar_lea.vmem %s0, %s241
        $region36: #{tpu_custom_call.1} parent=31 // pred_fallthru
          _
        // Predicated region
        $region37: #{tpu_custom_call.1} parent=31 // pred_check
          %p243 = pneg %p62
        $region38: #{tpu_custom_call.1} parent=31 // pred_check_branch
          %245 = sbr.rel (%p243) target = $region40
        $region39: #{tpu_custom_call.1} parent=31 // pred_region
          %p246 = scmp.lt.s32.totalorder %s16, 1
          %s247 = scalar_select %p246, %s16, 1
          %s248 = smul.addr %s247, 4
          %s249 = smul.addr %s248, 8
          %s250 = scalar_lea.vmem %s1, %s249
        $region40: #{tpu_custom_call.1} parent=31 // pred_fallthru
          _
        // Predicated region
        $region41: #{tpu_custom_call.1} parent=31 // pred_check
          %p251 = pneg %p88
        $region42: #{tpu_custom_call.1} parent=31 // pred_check_branch
          %253 = sbr.rel (%p251) target = $region44
        $region43: #{tpu_custom_call.1} parent=31 // pred_region
          %p254 = scmp.lt.s32.totalorder %s16, 1
          %s255 = scalar_select %p254, %s16, 1
          %s256 = smul.addr %s255, 4
          %s257 = smul.addr %s256, 8
          %s258 = scalar_lea.vmem %s2, %s257
        $region44: #{tpu_custom_call.1} parent=31 // pred_fallthru
          _
      $region32: #{tpu_custom_call.1} parent=5 // pred_fallthru
        _
      %p259 = scmp.le.s32.totalorder 1, %s16
      %p260 = scmp.lt.s32.totalorder %s16, 3
      %p261 = pnand %p259, %p260
      %p262 = pneg %p261
      // Predicated region
      $region45: #{tpu_custom_call.1} parent=5 // pred_check
        _
      $region46: #{tpu_custom_call.1} parent=5 // pred_check_branch
        %264 = sbr.rel (%p261) target = $region48
      $region47: #{tpu_custom_call.1} parent=5 // pred_region
        %s265 = ssub.s32 %s16, 1
        %p266 = scmp.lt.s32.totalorder %s21, 1
        %s267 = scalar_select %p266, %s21, 1
        %s268 = smul.addr %s267, 4
        %s269 = smul.addr %s268, 8
        %s270 = scalar_lea.vmem %s0, %s269
        %p271 = pneg %p42
        %p272 = pneg %p39
        %p273 = scmp.lt.s32.totalorder %s21, 1
        %s274 = scalar_select %p273, %s21, 1
        %s275 = smul.addr %s274, 4
        %s276 = smul.addr %s275, 8
        %s277 = scalar_lea.vmem %s1, %s276
        %p278 = pneg %p68
        %p279 = pneg %p65
        %p280 = scmp.lt.s32.totalorder %s21, 1
        %s281 = scalar_select %p280, %s21, 1
        %s282 = smul.addr %s281, 4
        %s283 = smul.addr %s282, 8
        %s284 = scalar_lea.vmem %s2, %s283
        %p285 = pneg %p94
        %p286 = pneg %p91
        %p287 = pneg %p115
        %p288 = pneg %p112
        %p289 = pneg %p136
        %p290 = pneg %p133
        %p291 = pneg %p157
        %p292 = pneg %p154
        %p293 = pneg %p178
        %p294 = pneg %p175
        %p295 = pneg %p204
        %p296 = pneg %p201
        %s297 = sand.u32 %s191, 1
        %s298 = scalar_lea.sflag [#allocation4], %s297
        %s299 = sand.u32 %s191, 1
        %s300 = smul.addr %s299, 32
        %s301 = scalar_lea.vmem [#allocation3], %s300
        %p302 = scmp.lt.s32.totalorder %s21, 1
        %s303 = scalar_select %p302, %s21, 1
        %s304 = smul.addr %s303, 4
        %s305 = smul.addr %s304, 8
        %s306 = scalar_lea.vmem %s0, %s305
        %p307 = scmp.lt.s32.totalorder %s21, 1
        %s308 = scalar_select %p307, %s21, 1
        %s309 = smul.addr %s308, 4
        %s310 = smul.addr %s309, 8
        %s311 = scalar_lea.vmem %s1, %s310
        %p312 = scmp.lt.s32.totalorder %s21, 1
        %s313 = scalar_select %p312, %s21, 1
        %s314 = smul.addr %s313, 4
        %s315 = smul.addr %s314, 8
        %s316 = scalar_lea.vmem %s2, %s315
        %v320 = vld [vmem:[%s306] sm:$0xff]
        %v321 = vld [vmem:[%s306 + $0x8] sm:$0xff]
        %v322 = vld [vmem:[%s306 + $0x10] sm:$0xff]
        %v323 = vld [vmem:[%s306 + $0x18] sm:$0xff]
        %v324 = vlaneseq
        %v325 = vand.u32 %v324, 127
        %v326 = vadd.s32 %v325, 128
        %vm327 = vcmp.lt.s32.totalorder %v325, 0
        %v328 = vsub.s32 0, %v325
        %v329 = vsel %vm327, %v328, %v325
        %v330 = vshrl.u32 %v329, 4
        %v331 = vand.u32 %v329, 15
        %v332 = vsub.s32 0, %v331
        %v333 = vsel %vm327, %v332, %v331
        %vm334 = vcmp.lt.s32.totalorder %v326, 0
        %v335 = vsub.s32 0, %v326
        %v336 = vsel %vm334, %v335, %v326
        %v337 = vshrl.u32 %v336, 4
        %v338 = vand.u32 %v336, 15
        %v339 = vsub.s32 0, %v338
        %v340 = vsel %vm334, %v339, %v338
        %vm341 = vcmp.ne.s32.totalorder %v333, 0
        %vm342 = vcmp.ne.s32.totalorder %v340, 0
        %vm343 = vcmp.lt.s32.totalorder %v333, 0
        %vm344 = vcmp.lt.s32.totalorder %v340, 0
        %vm345 = vmand %vm343, %vm341
        %vm346 = vmand %vm344, %vm342
        %v347 = vadd.s32 %v333, 16
        %v348 = vadd.s32 %v340, 16
        %v349 = vsel %vm345, %v347, %v333
        %v350 = vsel %vm346, %v348, %v340
        %vm351 = vcmp.gt.s32.totalorder %v349, 0
        %vm352 = vcmp.gt.s32.totalorder %v350, 0
        %vm353 = vcmp.lt.s32.totalorder %v349, 15
        %vm354 = vcmp.lt.s32.totalorder %v350, 15
        %v355 = vpack.c.bf16 %v322, %v320
        %v356 = vpack.c.bf16 %v323, %v321
        %359 = vrot.lane.b32.xlu0 %v355, 17
        %v360 = vpop.permute.xlu0 %359
        %361 = vrot.lane.b32.xlu0 %v356, 17
        %v362 = vpop.permute.xlu0 %361
        %vm363 = vcmask 138240
        %v364 = vsel %vm363, %v360, %v362
        %vm366 = vcmask 138240
        %v369 = vsel %vm366, 0, %v360
        %v371 = vsel %vm351, 1, 0
        %v372 = vsel %vm352, 1, 0
        %vm373 = vcmp.eq.s32.totalorder %v371, 1
        %vm374 = vcmp.eq.s32.totalorder %v372, 1
        %vm375 = vmpackc.low %vm374, %vm373
        %v376 = vsel %vm375, 65537, 0
        %v377 = vlaneseq
        %v378 = vshrl.u32 %v377, 7
        %v379 = vsub.s32 0, %v378
        %v380 = vrot.slane %v376, %v379
        %v381 = vlaneseq
        %v382 = vshrl.u32 %v381, 7
        %v383 = vsub.s32 4, %v382
        %v384 = vrot.slane %v376, %v383
        %vm385 = vcmp.ne.s16.totalorder %v380, 0
        %vm386 = vcmp.ne.s16.totalorder %v384, 0
        %v387 = vsel %vm385, %v369, 0
        %v388 = vsel %vm386, %v364, 0
        %389 = vst [vmem:[#allocation2] sm:$0xff] %v387
        %390 = vst [vmem:[#allocation2 + $0x8] sm:$0xff] %v388
        %391 = vrot.lane.b32.xlu0 %v355, 16
        %v392 = vpop.permute.xlu0 %391
        %393 = vrot.lane.b32.xlu0 %v356, 16
        %v394 = vpop.permute.xlu0 %393
        %vm395 = vcmask 130048
        %v396 = vsel %vm395, %v392, %v394
        %vm398 = vcmask 130048
        %v400 = vsel %vm398, 0, %v392
        %402 = vst [vmem:[#allocation2 + $0x10] sm:$0xff] %v400
        %403 = vst [vmem:[#allocation2 + $0x18] sm:$0xff] %v396
        %404 = vrot.lane.b32.xlu0 %v355, 15
        %v405 = vpop.permute.xlu0 %404
        %406 = vrot.lane.b32.xlu0 %v356, 15
        %v407 = vpop.permute.xlu0 %406
        %vm408 = vcmask 121856
        %v409 = vsel %vm408, %v405, %v407
        %vm411 = vcmask 121856
        %v413 = vsel %vm411, 0, %v405
        %v415 = vsel %vm353, 1, 0
        %v416 = vsel %vm354, 1, 0
        %vm417 = vcmp.eq.s32.totalorder %v415, 1
        %vm418 = vcmp.eq.s32.totalorder %v416, 1
        %vm419 = vmpackc.low %vm418, %vm417
        %v420 = vsel %vm419, 65537, 0
        %v421 = vlaneseq
        %v422 = vshrl.u32 %v421, 7
        %v423 = vsub.s32 0, %v422
        %v424 = vrot.slane %v420, %v423
        %v425 = vlaneseq
        %v426 = vshrl.u32 %v425, 7
        %v427 = vsub.s32 4, %v426
        %v428 = vrot.slane %v420, %v427
        %vm429 = vcmp.ne.s16.totalorder %v424, 0
        %vm430 = vcmp.ne.s16.totalorder %v428, 0
        %v431 = vsel %vm429, %v413, 0
        %v432 = vsel %vm430, %v409, 0
        %433 = vst [vmem:[#allocation2 + $0x20] sm:$0xff] %v431
        %434 = vst [vmem:[#allocation2 + $0x28] sm:$0xff] %v432
        %435 = vrot.lane.b32.xlu0 %v355, 1
        %v436 = vpop.permute.xlu0 %435
        %437 = vrot.lane.b32.xlu0 %v356, 1
        %v438 = vpop.permute.xlu0 %437
        %vm439 = vcmask 7168
        %v440 = vsel %vm439, %v436, %v438
        %vm442 = vcmask 7168
        %v444 = vsel %vm442, 0, %v436
        %v446 = vsel %vm385, %v444, 0
        %v447 = vsel %vm386, %v440, 0
        %448 = vst [vmem:[#allocation2 + $0x30] sm:$0xff] %v446
        %449 = vst [vmem:[#allocation2 + $0x38] sm:$0xff] %v447
        %450 = vst [vmem:[#allocation2 + $0x40] sm:$0xff] %v355
        %451 = vst [vmem:[#allocation2 + $0x48] sm:$0xff] %v356
        %452 = vrot.lane.b32.xlu0 %v355, 127
        %v453 = vpop.permute.xlu0 %452
        %454 = vrot.lane.b32.xlu0 %v356, 127
        %v455 = vpop.permute.xlu0 %454
        %vm456 = vcmask 1039360
        %v457 = vsel %vm456, %v453, %v455
        %vm459 = vcmask 1039360
        %v461 = vsel %vm459, %v455, 0
        %v463 = vsel %vm429, %v457, 0
        %v464 = vsel %vm430, %v461, 0
        %465 = vst [vmem:[#allocation2 + $0x50] sm:$0xff] %v463
        %466 = vst [vmem:[#allocation2 + $0x58] sm:$0xff] %v464
        %467 = vrot.lane.b32.xlu0 %v355, 113
        %v468 = vpop.permute.xlu0 %467
        %469 = vrot.lane.b32.xlu0 %v356, 113
        %v470 = vpop.permute.xlu0 %469
        %vm471 = vcmask 924672
        %v472 = vsel %vm471, %v468, %v470
        %vm474 = vcmask 924672
        %v476 = vsel %vm474, %v470, 0
        %v478 = vsel %vm385, %v472, 0
        %v479 = vsel %vm386, %v476, 0
        %480 = vst [vmem:[#allocation2 + $0x60] sm:$0xff] %v478
        %481 = vst [vmem:[#allocation2 + $0x68] sm:$0xff] %v479
        %482 = vrot.lane.b32.xlu0 %v355, 112
        %v483 = vpop.permute.xlu0 %482
        %484 = vrot.lane.b32.xlu0 %v356, 112
        %v485 = vpop.permute.xlu0 %484
        %vm486 = vcmask 916480
        %v487 = vsel %vm486, %v483, %v485
        %vm489 = vcmask 916480
        %v491 = vsel %vm489, %v485, 0
        %493 = vst [vmem:[#allocation2 + $0x70] sm:$0xff] %v487
        %494 = vst [vmem:[#allocation2 + $0x78] sm:$0xff] %v491
        %495 = vrot.lane.b32.xlu0 %v355, 111
        %v496 = vpop.permute.xlu0 %495
        %497 = vrot.lane.b32.xlu0 %v356, 111
        %v498 = vpop.permute.xlu0 %497
        %vm499 = vcmask 908288
        %v500 = vsel %vm499, %v496, %v498
        %vm502 = vcmask 908288
        %v504 = vsel %vm502, %v498, 0
        %v506 = vsel %vm429, %v500, 0
        %v507 = vsel %vm430, %v504, 0
        %508 = vst [vmem:[#allocation2 + $0x80] sm:$0xff] %v506
        %509 = vst [vmem:[#allocation2 + $0x88] sm:$0xff] %v507
        %v510 = vld [vmem:[%s3] sm:$0xff]
        %v511 = vld [vmem:[%s3 + $0x8] sm:$0xff]
        %v512 = vld [vmem:[#allocation2] sm:$0xff]
        %v513 = vld [vmem:[#allocation2 + $0x8] sm:$0xff]
        %v514 = vld [vmem:[#allocation2 + $0x10] sm:$0xff]
        %v515 = vld [vmem:[#allocation2 + $0x18] sm:$0xff]
        %v516 = vld [vmem:[#allocation2 + $0x20] sm:$0xff]
        %v517 = vld [vmem:[#allocation2 + $0x28] sm:$0xff]
        %v518 = vld [vmem:[#allocation2 + $0x30] sm:$0xff]
        %v519 = vld [vmem:[#allocation2 + $0x38] sm:$0xff]
        %v520 = vld [vmem:[#allocation2 + $0x40] sm:$0xff]
        %v521 = vld [vmem:[#allocation2 + $0x48] sm:$0xff]
        %v522 = vld [vmem:[#allocation2 + $0x50] sm:$0xff]
        %v523 = vld [vmem:[#allocation2 + $0x58] sm:$0xff]
        %v524 = vld [vmem:[#allocation2 + $0x60] sm:$0xff]
        %v525 = vld [vmem:[#allocation2 + $0x68] sm:$0xff]
        %v526 = vld [vmem:[#allocation2 + $0x70] sm:$0xff]
        %v527 = vld [vmem:[#allocation2 + $0x78] sm:$0xff]
        %v528 = vld [vmem:[#allocation2 + $0x80] sm:$0xff]
        %v529 = vld [vmem:[#allocation2 + $0x88] sm:$0xff]
        %v530 = vld [vmem:[%s4] sm:$0xff]
        %v531 = vld [vmem:[%s4 + $0x8] sm:$0xff]
        %533 = vset.pattern.permute.xlu0 0
        %534 = vperm.xlu0 %533, %v530
        %v535 = vpop.permute.xlu0 %534
        %538 = vset.pattern.permute.xlu0 0
        %539 = vperm.xlu0 %538, %v531
        %v540 = vpop.permute.xlu0 %539
        %v544 = vunpack.c.l.b16 %v510
        %v545 = vunpack.c.h.b16 %v510
        %v546 = vunpack.c.l.b16 %v511
        %v547 = vunpack.c.h.b16 %v511
        %v548 = vpack.c.b16 %v546, %v544
        %v549 = vpack.c.b16 %v547, %v545
        %v552 = vsel %vm398, %v549, 0
        %554 = vmatprep.subr.bf16.mxu0 %v513
        %555 = vmatpush1.bf16.msra.mxu0 %v512
        %556 = vmatprep.subr.bf16.mxu0 %v515
        %557 = vmatpush1.bf16.msra.mxu0 %v514
        %558 = vmatprep.subr.bf16.mxu0 %v517
        %559 = vmatpush1.bf16.msra.mxu0 %v516
        %560 = vmatprep.subr.bf16.mxu0 %v519
        %561 = vmatpush1.bf16.msra.mxu0 %v518
        %562 = vmatprep.subr.bf16.mxu0 %v521
        %563 = vmatpush1.bf16.msra.mxu0 %v520
        %564 = vmatprep.subr.bf16.mxu0 %v523
        %565 = vmatpush1.bf16.msra.mxu0 %v522
        %566 = vmatprep.subr.bf16.mxu0 %v525
        %567 = vmatpush1.bf16.msra.mxu0 %v524
        %568 = vmatprep.subr.bf16.mxu0 %v527
        %569 = vmatpush1.bf16.msra.mxu0 %v526
        %570 = vmatprep.subr.bf16.mxu0 %v529
        %571 = vmatpush1.bf16.msra.mxu0 %v528
        %572 = vmatprep.subr.bf16.mxu0 0
        %573 = vmatpush1.bf16.msra.mxu0 0
        %574 = vmatprep.subr.bf16.mxu0 0
        %575 = vmatpush1.bf16.msra.mxu0 0
        %576 = vmatprep.subr.bf16.mxu0 0
        %577 = vmatpush1.bf16.msra.mxu0 0
        %578 = vmatprep.subr.bf16.mxu0 0
        %579 = vmatpush1.bf16.msra.mxu0 0
        %580 = vmatprep.subr.bf16.mxu0 0
        %581 = vmatpush1.bf16.msra.mxu0 0
        %582 = vmatprep.subr.bf16.mxu0 0
        %583 = vmatpush1.bf16.msra.mxu0 0
        %584 = vmatprep.subr.bf16.mxu0 0
        %585 = vmatpush1.bf16.msra.mxu0 0
        %586 = vmatprep.mubr.bf16.mxu0 %v552
        %587 = vmatmul.mubr.bf16.gmra.mrb[0].mxu0 %v548
        %v588 = vpop.f32.mrb[0].mxu0
        %v589 = vadd.f32 %v535, %v588
        %v590 = vpop.f32.mrb[0].mxu0
        %v591 = vadd.f32 %v535, %v590
        %v592 = vpop.f32.mrb[0].mxu0
        %v593 = vadd.f32 %v540, %v592
        %v594 = vpop.f32.mrb[0].mxu0
        %v595 = vadd.f32 %v540, %v594
        %596 = vdwg.mxu0
        %v597 = vadd.f32 %v589, %v591
        %598 = vadd.xlane.f32.xlu0 %v597
        %v599 = vpop.xlane.xlu0 %598
        %v600 = vadd.f32 %v593, %v595
        %601 = vadd.xlane.f32.xlu0 %v600
        %v602 = vpop.xlane.xlu0 %601
        %v603 = vrcp.pop 256.0
        %v604 = vmul.f32 %v599, %v603
        %v605 = vmul.f32 %v602, %v603
        %v606 = vsub.f32 %v589, %v604
        %v607 = vsub.f32 %v591, %v604
        %v608 = vsub.f32 %v593, %v605
        %v609 = vsub.f32 %v595, %v605
        %v610 = vmul.f32 %v606, %v606
        %v611 = vmul.f32 %v607, %v607
        %v612 = vmul.f32 %v608, %v608
        %v613 = vmul.f32 %v609, %v609
        %v614 = vadd.f32 %v610, %v611
        %615 = vadd.xlane.f32.xlu0 %v614
        %v616 = vpop.xlane.xlu0 %615
        %v617 = vadd.f32 %v612, %v613
        %618 = vadd.xlane.f32.xlu0 %v617
        %v619 = vpop.xlane.xlu0 %618
        %v620 = vmul.f32 %v616, %v603
        %v621 = vmul.f32 %v619, %v603
        %v622 = vadd.f32 %v620, 1e-08
        %v623 = vadd.f32 %v621, 1e-08
        %v624 = vrsqrt.pop %v622
        %v625 = vrsqrt.pop %v623
        %v626 = vmul.f32 %v606, %v624
        %v627 = vmul.f32 %v607, %v624
        %v628 = vmul.f32 %v608, %v625
        %v629 = vmul.f32 %v609, %v625
        %v630 = vld [vmem:[%s311] sm:$0xff]
        %v631 = vld [vmem:[%s311 + $0x8] sm:$0xff]
        %v632 = vld [vmem:[%s311 + $0x10] sm:$0xff]
        %v633 = vld [vmem:[%s311 + $0x18] sm:$0xff]
        %v634 = vadd.f32 %v630, 1.0
        %v635 = vadd.f32 %v631, 1.0
        %637 = vset.pattern.permute.xlu0 0
        %638 = vperm.xlu0 %637, %v634
        %v639 = vpop.permute.xlu0 %638
        %642 = vset.pattern.permute.xlu0 0
        %643 = vperm.xlu0 %642, %v635
        %v644 = vpop.permute.xlu0 %643
        %v646 = vmul.f32 %v626, %v639
        %v647 = vmul.f32 %v627, %v639
        %v648 = vmul.f32 %v628, %v644
        %v649 = vmul.f32 %v629, %v644
        %651 = vset.pattern.permute.xlu0 0
        %652 = vperm.xlu0 %651, %v632
        %v653 = vpop.permute.xlu0 %652
        %656 = vset.pattern.permute.xlu0 0
        %657 = vperm.xlu0 %656, %v633
        %v658 = vpop.permute.xlu0 %657
        %v660 = vadd.f32 %v646, %v653
        %v661 = vadd.f32 %v647, %v653
        %v662 = vadd.f32 %v648, %v658
        %v663 = vadd.f32 %v649, %v658
        %v664 = vmax.f32 %v660, 0.0
        %v665 = vmax.f32 %v661, 0.0
        %v666 = vmax.f32 %v662, 0.0
        %v667 = vmax.f32 %v663, 0.0
        %v668 = vpack.c.bf16 %v666, %v664
        %v669 = vpack.c.bf16 %v667, %v665
        %672 = vrot.lane.b32.xlu0 %v668, 17
        %v673 = vpop.permute.xlu0 %672
        %674 = vrot.lane.b32.xlu0 %v669, 17
        %v675 = vpop.permute.xlu0 %674
        %v676 = vsel %vm363, %v673, %v675
        %v679 = vsel %vm366, 0, %v673
        %v681 = vsel %vm385, %v679, 0
        %v682 = vsel %vm386, %v676, 0
        %683 = vst [vmem:[#allocation2] sm:$0xff] %v681
        %684 = vst [vmem:[#allocation2 + $0x8] sm:$0xff] %v682
        %685 = vrot.lane.b32.xlu0 %v668, 16
        %v686 = vpop.permute.xlu0 %685
        %687 = vrot.lane.b32.xlu0 %v669, 16
        %v688 = vpop.permute.xlu0 %687
        %v689 = vsel %vm395, %v686, %v688
        %v692 = vsel %vm398, 0, %v686
        %694 = vst [vmem:[#allocation2 + $0x10] sm:$0xff] %v692
        %695 = vst [vmem:[#allocation2 + $0x18] sm:$0xff] %v689
        %696 = vrot.lane.b32.xlu0 %v668, 15
        %v697 = vpop.permute.xlu0 %696
        %698 = vrot.lane.b32.xlu0 %v669, 15
        %v699 = vpop.permute.xlu0 %698
        %v700 = vsel %vm408, %v697, %v699
        %v703 = vsel %vm411, 0, %v697
        %v705 = vsel %vm429, %v703, 0
        %v706 = vsel %vm430, %v700, 0
        %707 = vst [vmem:[#allocation2 + $0x20] sm:$0xff] %v705
        %708 = vst [vmem:[#allocation2 + $0x28] sm:$0xff] %v706
        %709 = vrot.lane.b32.xlu0 %v668, 1
        %v710 = vpop.permute.xlu0 %709
        %711 = vrot.lane.b32.xlu0 %v669, 1
        %v712 = vpop.permute.xlu0 %711
        %v713 = vsel %vm439, %v710, %v712
        %v716 = vsel %vm442, 0, %v710
        %v718 = vsel %vm385, %v716, 0
        %v719 = vsel %vm386, %v713, 0
        %720 = vst [vmem:[#allocation2 + $0x30] sm:$0xff] %v718
        %721 = vst [vmem:[#allocation2 + $0x38] sm:$0xff] %v719
        %722 = vst [vmem:[#allocation2 + $0x40] sm:$0xff] %v668
        %723 = vst [vmem:[#allocation2 + $0x48] sm:$0xff] %v669
        %724 = vrot.lane.b32.xlu0 %v668, 127
        %v725 = vpop.permute.xlu0 %724
        %726 = vrot.lane.b32.xlu0 %v669, 127
        %v727 = vpop.permute.xlu0 %726
        %v728 = vsel %vm456, %v725, %v727
        %v731 = vsel %vm459, %v727, 0
        %v733 = vsel %vm429, %v728, 0
        %v734 = vsel %vm430, %v731, 0
        %735 = vst [vmem:[#allocation2 + $0x50] sm:$0xff] %v733
        %736 = vst [vmem:[#allocation2 + $0x58] sm:$0xff] %v734
        %737 = vrot.lane.b32.xlu0 %v668, 113
        %v738 = vpop.permute.xlu0 %737
        %739 = vrot.lane.b32.xlu0 %v669, 113
        %v740 = vpop.permute.xlu0 %739
        %v741 = vsel %vm471, %v738, %v740
        %v744 = vsel %vm474, %v740, 0
        %v746 = vsel %vm385, %v741, 0
        %v747 = vsel %vm386, %v744, 0
        %748 = vst [vmem:[#allocation2 + $0x60] sm:$0xff] %v746
        %749 = vst [vmem:[#allocation2 + $0x68] sm:$0xff] %v747
        %750 = vrot.lane.b32.xlu0 %v668, 112
        %v751 = vpop.permute.xlu0 %750
        %752 = vrot.lane.b32.xlu0 %v669, 112
        %v753 = vpop.permute.xlu0 %752
        %v754 = vsel %vm486, %v751, %v753
        %v757 = vsel %vm489, %v753, 0
        %759 = vst [vmem:[#allocation2 + $0x70] sm:$0xff] %v754
        %760 = vst [vmem:[#allocation2 + $0x78] sm:$0xff] %v757
        %761 = vrot.lane.b32.xlu0 %v668, 111
        %v762 = vpop.permute.xlu0 %761
        %763 = vrot.lane.b32.xlu0 %v669, 111
        %v764 = vpop.permute.xlu0 %763
        %v765 = vsel %vm499, %v762, %v764
        %v768 = vsel %vm502, %v764, 0
        %v770 = vsel %vm429, %v765, 0
        %v771 = vsel %vm430, %v768, 0
        %772 = vst [vmem:[#allocation2 + $0x80] sm:$0xff] %v770
        %773 = vst [vmem:[#allocation2 + $0x88] sm:$0xff] %v771
        %v774 = vld [vmem:[%s5] sm:$0xff]
        %v775 = vld [vmem:[%s5 + $0x8] sm:$0xff]
        %v776 = vld [vmem:[#allocation2] sm:$0xff]
        %v777 = vld [vmem:[#allocation2 + $0x8] sm:$0xff]
        %v778 = vld [vmem:[#allocation2 + $0x10] sm:$0xff]
        %v779 = vld [vmem:[#allocation2 + $0x18] sm:$0xff]
        %v780 = vld [vmem:[#allocation2 + $0x20] sm:$0xff]
        %v781 = vld [vmem:[#allocation2 + $0x28] sm:$0xff]
        %v782 = vld [vmem:[#allocation2 + $0x30] sm:$0xff]
        %v783 = vld [vmem:[#allocation2 + $0x38] sm:$0xff]
        %v784 = vld [vmem:[#allocation2 + $0x40] sm:$0xff]
        %v785 = vld [vmem:[#allocation2 + $0x48] sm:$0xff]
        %v786 = vld [vmem:[#allocation2 + $0x50] sm:$0xff]
        %v787 = vld [vmem:[#allocation2 + $0x58] sm:$0xff]
        %v788 = vld [vmem:[#allocation2 + $0x60] sm:$0xff]
        %v789 = vld [vmem:[#allocation2 + $0x68] sm:$0xff]
        %v790 = vld [vmem:[#allocation2 + $0x70] sm:$0xff]
        %v791 = vld [vmem:[#allocation2 + $0x78] sm:$0xff]
        %v792 = vld [vmem:[#allocation2 + $0x80] sm:$0xff]
        %v793 = vld [vmem:[#allocation2 + $0x88] sm:$0xff]
        %v794 = vld [vmem:[%s6] sm:$0xff]
        %v795 = vld [vmem:[%s6 + $0x8] sm:$0xff]
        %797 = vset.pattern.permute.xlu0 0
        %798 = vperm.xlu0 %797, %v794
        %v799 = vpop.permute.xlu0 %798
        %802 = vset.pattern.permute.xlu0 0
        %803 = vperm.xlu0 %802, %v795
        %v804 = vpop.permute.xlu0 %803
        %v808 = vunpack.c.l.b16 %v774
        %v809 = vunpack.c.h.b16 %v774
        %v810 = vunpack.c.l.b16 %v775
        %v811 = vunpack.c.h.b16 %v775
        %v812 = vpack.c.b16 %v810, %v808
        %v813 = vpack.c.b16 %v811, %v809
        %v816 = vsel %vm398, %v813, 0
        %818 = vmatprep.subr.bf16.mxu0 %v777
        %819 = vmatpush1.bf16.msra.mxu0 %v776
        %820 = vmatprep.subr.bf16.mxu0 %v779
        %821 = vmatpush1.bf16.msra.mxu0 %v778
        %822 = vmatprep.subr.bf16.mxu0 %v781
        %823 = vmatpush1.bf16.msra.mxu0 %v780
        %824 = vmatprep.subr.bf16.mxu0 %v783
        %825 = vmatpush1.bf16.msra.mxu0 %v782
        %826 = vmatprep.subr.bf16.mxu0 %v785
        %827 = vmatpush1.bf16.msra.mxu0 %v784
        %828 = vmatprep.subr.bf16.mxu0 %v787
        %829 = vmatpush1.bf16.msra.mxu0 %v786
        %830 = vmatprep.subr.bf16.mxu0 %v789
        %831 = vmatpush1.bf16.msra.mxu0 %v788
        %832 = vmatprep.subr.bf16.mxu0 %v791
        %833 = vmatpush1.bf16.msra.mxu0 %v790
        %834 = vmatprep.subr.bf16.mxu0 %v793
        %835 = vmatpush1.bf16.msra.mxu0 %v792
        %836 = vmatprep.subr.bf16.mxu0 0
        %837 = vmatpush1.bf16.msra.mxu0 0
        %838 = vmatprep.subr.bf16.mxu0 0
        %839 = vmatpush1.bf16.msra.mxu0 0
        %840 = vmatprep.subr.bf16.mxu0 0
        %841 = vmatpush1.bf16.msra.mxu0 0
        %842 = vmatprep.subr.bf16.mxu0 0
        %843 = vmatpush1.bf16.msra.mxu0 0
        %844 = vmatprep.subr.bf16.mxu0 0
        %845 = vmatpush1.bf16.msra.mxu0 0
        %846 = vmatprep.subr.bf16.mxu0 0
        %847 = vmatpush1.bf16.msra.mxu0 0
        %848 = vmatprep.subr.bf16.mxu0 0
        %849 = vmatpush1.bf16.msra.mxu0 0
        %850 = vmatprep.mubr.bf16.mxu0 %v816
        %851 = vmatmul.mubr.bf16.gmra.mrb[0].mxu0 %v812
        %v852 = vpop.f32.mrb[0].mxu0
        %v853 = vadd.f32 %v799, %v852
        %v854 = vpop.f32.mrb[0].mxu0
        %v855 = vadd.f32 %v799, %v854
        %v856 = vpop.f32.mrb[0].mxu0
        %v857 = vadd.f32 %v804, %v856
        %v858 = vpop.f32.mrb[0].mxu0
        %v859 = vadd.f32 %v804, %v858
        %860 = vdwg.mxu0
        %v861 = vadd.f32 %v853, %v855
        %862 = vadd.xlane.f32.xlu0 %v861
        %v863 = vpop.xlane.xlu0 %862
        %v864 = vadd.f32 %v857, %v859
        %865 = vadd.xlane.f32.xlu0 %v864
        %v866 = vpop.xlane.xlu0 %865
        %v867 = vmul.f32 %v863, %v603
        %v868 = vmul.f32 %v866, %v603
        %v869 = vsub.f32 %v853, %v867
        %v870 = vsub.f32 %v855, %v867
        %v871 = vsub.f32 %v857, %v868
        %v872 = vsub.f32 %v859, %v868
        %v873 = vmul.f32 %v869, %v869
        %v874 = vmul.f32 %v870, %v870
        %v875 = vmul.f32 %v871, %v871
        %v876 = vmul.f32 %v872, %v872
        %v877 = vadd.f32 %v873, %v874
        %878 = vadd.xlane.f32.xlu0 %v877
        %v879 = vpop.xlane.xlu0 %878
        %v880 = vadd.f32 %v875, %v876
        %881 = vadd.xlane.f32.xlu0 %v880
        %v882 = vpop.xlane.xlu0 %881
        %v883 = vmul.f32 %v879, %v603
        %v884 = vmul.f32 %v882, %v603
        %v885 = vadd.f32 %v883, 1e-08
        %v886 = vadd.f32 %v884, 1e-08
        %v887 = vrsqrt.pop %v885
        %v888 = vrsqrt.pop %v886
        %v889 = vmul.f32 %v869, %v887
        %v890 = vmul.f32 %v870, %v887
        %v891 = vmul.f32 %v871, %v888
        %v892 = vmul.f32 %v872, %v888
        %v893 = vld [vmem:[%s316] sm:$0xff]
        %v894 = vld [vmem:[%s316 + $0x8] sm:$0xff]
        %v895 = vld [vmem:[%s316 + $0x10] sm:$0xff]
        %v896 = vld [vmem:[%s316 + $0x18] sm:$0xff]
        %v897 = vadd.f32 %v893, 1.0
        %v898 = vadd.f32 %v894, 1.0
        %900 = vset.pattern.permute.xlu0 0
        %901 = vperm.xlu0 %900, %v897
        %v902 = vpop.permute.xlu0 %901
        %905 = vset.pattern.permute.xlu0 0
        %906 = vperm.xlu0 %905, %v898
        %v907 = vpop.permute.xlu0 %906
        %v909 = vmul.f32 %v889, %v902
        %v910 = vmul.f32 %v890, %v902
        %v911 = vmul.f32 %v891, %v907
        %v912 = vmul.f32 %v892, %v907
        %914 = vset.pattern.permute.xlu0 0
        %915 = vperm.xlu0 %914, %v895
        %v916 = vpop.permute.xlu0 %915
        %919 = vset.pattern.permute.xlu0 0
        %920 = vperm.xlu0 %919, %v896
        %v921 = vpop.permute.xlu0 %920
        %v923 = vadd.f32 %v909, %v916
        %v924 = vadd.f32 %v910, %v916
        %v925 = vadd.f32 %v911, %v921
        %v926 = vadd.f32 %v912, %v921
        %v927 = vadd.f32 %v320, %v923
        %v928 = vadd.f32 %v321, %v924
        %v929 = vadd.f32 %v322, %v925
        %v930 = vadd.f32 %v323, %v926
        %931 = vst [vmem:[%s301] sm:$0xff] %v927
        %932 = vst [vmem:[%s301 + $0x8] sm:$0xff] %v928
        %933 = vst [vmem:[%s301 + $0x10] sm:$0xff] %v929
        %934 = vst [vmem:[%s301 + $0x18] sm:$0xff] %v930
        %s935 = sand.u32 %s191, 1
        %s936 = scalar_lea.sflag [#allocation4], %s935
        %s937 = sand.u32 %s191, 1
        %s938 = smul.addr %s937, 32
        %s939 = scalar_lea.vmem [#allocation3], %s938
        // Predicated region
        $region49: #{tpu_custom_call.1} parent=47 // pred_check
          %p940 = pneg %p201
        $region50: #{tpu_custom_call.1} parent=47 // pred_check_branch
          %942 = sbr.rel (%p940) target = $region52
        $region51: #{tpu_custom_call.1} parent=47 // pred_region
          %s944 = ssub.s32 512, 512
          %945 = vsyncadd %s936, %s944
          %s946 = smul.addr %s21, 4
          %s947 = smul.addr %s946, 128
          %s948 = scalar_lea.hbm %s7, %s947
          %s949 = sshll.u32 %s939, 4
          %s950 = int_to_ptr.vmem [resolvable:$true] %s949
          %955 = dma.vmem_to_hbm [thread:$0]  %s950, 512, %s948, %s936, 256, 256, 16
        $region52: #{tpu_custom_call.1} parent=47 // pred_fallthru
          _
      $region48: #{tpu_custom_call.1} parent=5 // pred_fallthru
        _
      %p956 = scmp.le.s32.totalorder 2, %s16
      // Predicated region
      $region53: #{tpu_custom_call.1} parent=5 // pred_check
        %p957 = pneg %p956
      $region54: #{tpu_custom_call.1} parent=5 // pred_check_branch
        %959 = sbr.rel (%p957) target = $region56
      $region55: #{tpu_custom_call.1} parent=5 // pred_region
        %s960 = ssub.s32 %s16, 2
        // Predicated region
        $region57: #{tpu_custom_call.1} parent=55 // pred_check
          %p961 = pneg %p207
        $region58: #{tpu_custom_call.1} parent=55 // pred_check_branch
          %963 = sbr.rel (%p961) target = $region60
        $region59: #{tpu_custom_call.1} parent=55 // pred_region
          %s964 = sand.u32 %s192, 1
          %s965 = scalar_lea.sflag [#allocation4], %s964
          %s966 = sand.u32 %s192, 1
          %s967 = smul.addr %s966, 32
          %s968 = scalar_lea.vmem [#allocation3], %s967
          %969 = dma.done %s965, 512
        $region60: #{tpu_custom_call.1} parent=55 // pred_fallthru
          _
      $region56: #{tpu_custom_call.1} parent=5 // pred_fallthru
        _
    $region6: #{tpu_custom_call.1} parent=1 // loop_footer
      %s20 = sadd.s32 1, %s16
    $region7: #{tpu_custom_call.1} parent=1 // loop_footer_branch
      %15 = sbr.rel target = $region3
    $region8: #{tpu_custom_call.1} parent=1 // loop_exit
      _
    %970 = vsyncpa [#allocation4], 1
    %s971 = scalar_lea.sflag [#allocation4], 1
    %972 = vsyncpa %s971, 1

</llo_original>
